<compile_context>
chip_gen: v6e
topology: v6e:2x2x1
jax: 0.10.0
libtpu: 0.0.40
codegen_flags: <defaults>
</compile_context>

<pallas_src>
import math
import functools

import jax
import jax.numpy as jnp
from jax import lax
from jax.experimental import pallas as pl
from jax.experimental.pallas import tpu as pltpu


# Finite "-inf": exp(-1e30 - m) underflows to exactly 0.0 in f32, matching -inf
# masking whenever a row has at least one edge.
# TODO(synk): rows with zero edges give a uniform softmax here, not NaN as the
# torch -inf masking would.
_NEG = -1e30


# ----------------------------- Pallas kernel ------------------------------- #

def _fused_mhga_kernel(x_ref, adj_ref, wqkv_ref, wot_ref, b_ref, out_ref,
                       bias_scr, *, batch_block, num_nodes, num_heads, d_k,
                       use_reshape):
    """Fused multi-head graph attention + output Linear for `batch_block` graphs.

    x_ref    : (batch_block*N, E)   node embeddings, rows ordered (graph, node)
    adj_ref  : (batch_block, N, N)  adjacency matrices
    wqkv_ref : (E, 3*H*d_k)         stacked Q|K|V projections (Q pre-scaled)
    wot_ref  : (E, E)               output Linear weight, transposed (W^T)
    b_ref    : (1, E)               output Linear bias
    out_ref  : (batch_block*N, E)
    bias_scr : (batch_block*N, batch_block*N) VMEM scratch (block-diag mask)
    """
    N, H, Dk = num_nodes, num_heads, d_k
    R = batch_block * N
    HDk = H * Dk

    # ---- block-diagonal additive mask: adjacency + cross-graph masking ------
    bias_scr[...] = jnp.full((R, R), _NEG, jnp.float32)
    for b in range(batch_block):
        sl = slice(b * N, (b + 1) * N)
        bias_scr[sl, sl] = jnp.where(adj_ref[b] > 0, 0.0, _NEG)
    bias = bias_scr[...]                                      # (R, R)

    # ---- Q/K/V for ALL heads and ALL graphs in the block: one MXU push ------
    qkv = jnp.dot(x_ref[...], wqkv_ref[...],
                  preferred_element_type=jnp.float32)         # (R, 3*H*Dk)

    # ---- per-head masked softmax attention on the stacked (R, R) scores -----
    heads = []
    for h in range(H):
        q = qkv[:, h * Dk:(h + 1) * Dk]                       # (R, Dk)
        k = qkv[:, HDk + h * Dk:HDk + (h + 1) * Dk]
        v = qkv[:, 2 * HDk + h * Dk:2 * HDk + (h + 1) * Dk]
        s = lax.dot_general(q, k, (((1,), (1,)), ((), ())),
                            preferred_element_type=jnp.float32)   # q @ k^T
        s = s + bias                                          # (R, R)
        m = jnp.max(s, axis=-1, keepdims=True)
        p = jnp.exp(s - m)
        inv = pl.reciprocal(jnp.sum(p, axis=-1, keepdims=True), approx=False)
        heads.append(jnp.dot(p, v, preferred_element_type=jnp.float32) * inv)

    # ---- PyTorch raw reshape (B,H,N,Dk)->(B,N,H*Dk) fused with out proj -----
    # Row-major stack ordered (graph, head, node):
    #   s_all[(b*H + h)*N + n, :] = head h of graph b, node n.
    pieces = [heads[h][b * N:(b + 1) * N, :]
              for b in range(batch_block) for h in range(H)]
    s_all = jnp.concatenate(pieces, axis=0) if len(pieces) > 1 else pieces[0]

    if use_reshape:
        # Raw row-major reshape == torch's scramble: c[r, g*Dk+d] = s_all[r*H+g, d]
        c = s_all.reshape(R, HDk)
    else:
        # Proven-op fallback: the same gather done on the MXU with 0/1 selections
        # (only used if the Mosaic shape-cast above fails to lower).
        K0 = batch_block * H * N
        row = lax.broadcasted_iota(jnp.int32, (R, K0), 0)
        col = lax.broadcasted_iota(jnp.int32, (R, K0), 1)
        cols = []
        for g in range(H):
            sel = (col == row * H + g).astype(jnp.float32)    # (R, K0)
            cols.append(jnp.dot(sel, s_all,
                                preferred_element_type=jnp.float32))  # (R, Dk)
        c = jnp.concatenate(cols, axis=1)                     # (R, H*Dk)

    out_ref[...] = jnp.dot(c, wot_ref[...],
                           preferred_element_type=jnp.float32) + b_ref[...]


# ------------------------------- Wrapper ----------------------------------- #

def multihead_graph_attention(node_embeddings, adjacency_matrices, params,
                              *, batch_block=None):
    """Forward pass equivalent to MultiheadGraphAttention.forward."""
    wq, wk, wv, wo, bo = (params["wq"], params["wk"], params["wv"],
                          params["wo"], params["bo"])
    B, N, E = node_embeddings.shape
    H, _, Dk = wq.shape
    scale = 1.0 / math.sqrt(Dk)

    # Graphs per grid step: amortize per-step overhead / widen MXU M-dim, keep
    # batch_block*N <= 128, and keep >= 2 grid steps when B >= 2 (v7x has 2 TCs).
    if batch_block is None:
        rows_cap = max(1, 128 // N)
        want = pl.cdiv(B, 2) if B >= 2 else 1
        batch_block = max(1, min(rows_cap, want, B))
    num_steps = pl.cdiv(B, batch_block)
    B_pad = num_steps * batch_block

    if B_pad != B:  # pad the batch so it divides evenly; padded rows sliced off
        pad = B_pad - B
        node_embeddings = jnp.concatenate(
            [node_embeddings,
             jnp.zeros((pad, N, E), node_embeddings.dtype)], axis=0)
        adjacency_matrices = jnp.concatenate(
            [adjacency_matrices,
             jnp.broadcast_to(jnp.eye(N, dtype=adjacency_matrices.dtype),
                              (pad, N, N))], axis=0)

    # Stack per-head projections along lanes: (H, E, Dk) -> (E, H*Dk); column
    # block h is head h's projection. Q|K|V side by side -> one matmul, and the
    # softmax scale is folded into the Q weights (zero in-kernel ops).
    wq_s = jnp.transpose(wq, (1, 0, 2)).reshape(E, H * Dk) * scale
    wk_s = jnp.transpose(wk, (1, 0, 2)).reshape(E, H * Dk)
    wv_s = jnp.transpose(wv, (1, 0, 2)).reshape(E, H * Dk)
    w_qkv = jnp.concatenate([wq_s, wk_s, wv_s], axis=1)        # (E, 3*H*Dk)
    wo_t = wo.T                                                # (E, E)
    bo_2d = bo.reshape(1, E)

    R = batch_block * N
    x2d = node_embeddings.reshape(B_pad * N, E)

    def build(use_reshape):
        kernel = functools.partial(
            _fused_mhga_kernel, batch_block=batch_block, num_nodes=N,
            num_heads=H, d_k=Dk, use_reshape=use_reshape)
        return pl.pallas_call(
            kernel,
            out_shape=jax.ShapeDtypeStruct((B_pad * N, E), jnp.float32),
            grid_spec=pltpu.PrefetchScalarGridSpec(
                num_scalar_prefetch=0,
                grid=(num_steps,),
                in_specs=[
                    pl.BlockSpec((R, E), lambda i: (i, 0)),
                    pl.BlockSpec((batch_block, N, N), lambda i: (i, 0, 0)),
                    pl.BlockSpec((E, 3 * H * Dk), lambda i: (0, 0)),
                    pl.BlockSpec((E, E), lambda i: (0, 0)),
                    pl.BlockSpec((1, E), lambda i: (0, 0)),
                ],
                out_specs=pl.BlockSpec((R, E), lambda i: (i, 0)),
                scratch_shapes=[pltpu.VMEM((R, R), jnp.float32)],
            ),
            compiler_params=pltpu.CompilerParams(
                dimension_semantics=("parallel",),
            ),
        )

    args = (x2d, adjacency_matrices, w_qkv, wo_t, bo_2d)
    try:
        out2d = build(use_reshape=True)(*args)
    except Exception:
        # Mosaic could not lower the in-kernel shape-cast; use the MXU-gather path.
        out2d = build(use_reshape=False)(*args)

    return out2d.reshape(B_pad, N, E)[:B]


# --------------------------- Pure-JAX reference ----------------------------- #

def _reference(node_embeddings, adjacency_matrices, params):
    wq, wk, wv, wo, bo = (params["wq"], params["wk"], params["wv"],
                          params["wo"], params["bo"])
    B, N, E = node_embeddings.shape
    H, _, Dk = wq.shape
    xh = jnp.broadcast_to(node_embeddings[:, None], (B, H, N, E))
    Q = jnp.einsum("bhnd,hde->bhne", xh, wq)
    K = jnp.einsum("bhnd,hde->bhne", xh, wk)
    V = jnp.einsum("bhnd,hde->bhne", xh, wv)
    scores = jnp.einsum("bhne,bhme->bhnm", Q, K) / math.sqrt(Dk)
    adj_e = jnp.broadcast_to(adjacency_matrices[:, None], (B, H, N, N))
    scores = jnp.where(adj_e > 0, scores, -jnp.inf)
    weights = jax.nn.softmax(scores, axis=-1)
    heads = jnp.einsum("bhnm,bhme->bhne", weights, V)
    concat = jnp.reshape(heads, (B, N, E))     # raw row-major reshape (as in torch)
    return concat @ wo.T + bo


# --------------------------------- Main ------------------------------------ #

def _init_params(key, num_heads, embedding_size):
    d_k = embedding_size // num_heads
    k1, k2, k3, k4, k5 = jax.random.split(key, 5)
    bound_qkv = math.sqrt(6.0 / (embedding_size * d_k + num_heads * d_k))
    bound_lin = math.sqrt(1.0 / embedding_size)
    shape_qkv = (num_heads, embedding_size, d_k)
    return {
        "wq": jax.random.uniform(k1, shape_qkv, jnp.float32, -bound_qkv, bound_qkv),
        "wk": jax.random.uniform(k2, shape_qkv, jnp.float32, -bound_qkv, bound_qkv),
        "wv": jax.random.uniform(k3, shape_qkv, jnp.float32, -bound_qkv, bound_qkv),
        "wo": jax.random.uniform(k4, (embedding_size, embedding_size),
                                 jnp.float32, -bound_lin, bound_lin),
        "bo": jax.random.uniform(k5, (embedding_size,),
                                 jnp.float32, -bound_lin, bound_lin),
    }


if __name__ == "__main__":
    B, N, E, H = 4, 8, 32, 4   # batch, num_nodes, embedding_size, num_heads

    key = jax.random.PRNGKey(0)
    k_params, k_x, k_adj = jax.random.split(key, 3)

    params = _init_params(k_params, H, E)

    node_embeddings = jax.random.normal(k_x, (B, N, E), jnp.float32)
    # Random sparse adjacency + self loops (self loops avoid all-masked rows,
    # for which the -inf reference would produce NaN).
    adj = jax.random.bernoulli(k_adj, 0.4, (B, N, N)).astype(jnp.float32)
    adj = jnp.maximum(adj, jnp.eye(N, dtype=jnp.float32)[None])

    out = multihead_graph_attention(node_embeddings, adj, params)
    out = jax.block_until_ready(out)

    ref = _reference(node_embeddings, adj, params)
    assert out.shape == (B, N, E)
    assert jnp.allclose(out, ref, atol=2e-5, rtol=2e-5), "mismatch vs reference"

    print("KERNEL_OK")
</pallas_src>

<mosaic_0001>
module attributes {stable_mosaic.version = 11 : i64} {
  func.func @_fused_mhga_kernel(%arg0: i32, %arg1: memref<16x32xf32, #tpu.memory_space<vmem>>, %arg2: memref<2x8x8xf32, #tpu.memory_space<vmem>>, %arg3: memref<32x96xf32, #tpu.memory_space<vmem>>, %arg4: memref<32x32xf32, #tpu.memory_space<vmem>>, %arg5: memref<1x32xf32, #tpu.memory_space<vmem>>, %arg6: memref<16x32xf32, #tpu.memory_space<vmem>>, %arg7: memref<16x16xf32, #tpu.memory_space<vmem>>) attributes {dimension_semantics = [#tpu.dimension_semantics<parallel>], iteration_bounds = array<i64: 2>, scalar_prefetch = 0 : i64, scratch_operands = 1 : i64, tpu.core_type = #tpu.core_type<tc>, window_params = [{transform_indices = @transform_0, window_bounds = array<i64: 16, 32>}, {transform_indices = @transform_1, window_bounds = array<i64: 2, 8, 8>}, {pipeline_mode = #tpu.pipeline_mode<synchronous>, transform_indices = @transform_2, window_bounds = array<i64: 32, 96>}, {pipeline_mode = #tpu.pipeline_mode<synchronous>, transform_indices = @transform_3, window_bounds = array<i64: 32, 32>}, {pipeline_mode = #tpu.pipeline_mode<synchronous>, transform_indices = @transform_4, window_bounds = array<i64: 1, 32>}, {transform_indices = @transform_5, window_bounds = array<i64: 16, 32>}]} {
    %cst = arith.constant -1.000000e+30 : f32
    %0 = vector.broadcast %cst : f32 to vector<16x16xf32>
    %c0 = arith.constant 0 : index
    %c0_0 = arith.constant 0 : index
    %1 = vector.load %arg7[%c0, %c0_0] : memref<16x16xf32, #tpu.memory_space<vmem>>, vector<16x16xf32>
    tpu.vector_store %arg7[%c0, %c0_0], %0 {strides = array<i32>} : memref<16x16xf32, #tpu.memory_space<vmem>>, vector<16x16xf32>,
    %c0_1 = arith.constant 0 : index
    %c0_2 = arith.constant 0 : index
    %c0_3 = arith.constant 0 : index
    %2 = vector.load %arg2[%c0_1, %c0_2, %c0_3] : memref<2x8x8xf32, #tpu.memory_space<vmem>>, vector<1x8x8xf32>
    %3 = vector.shape_cast %2 : vector<1x8x8xf32> to vector<8x8xf32>
    %cst_4 = arith.constant 0.000000e+00 : f32
    %4 = vector.broadcast %cst_4 : f32 to vector<8x8xf32>
    %5 = arith.cmpf ogt, %3, %4 : vector<8x8xf32>
    %cst_5 = arith.constant 0.000000e+00 : f32
    %cst_6 = arith.constant -1.000000e+30 : f32
    %6 = vector.broadcast %cst_5 : f32 to vector<8x8xf32>
    %7 = vector.broadcast %cst_6 : f32 to vector<8x8xf32>
    %8 = arith.select %5, %6, %7 : vector<8x8xi1>, vector<8x8xf32>
    %c0_7 = arith.constant 0 : index
    %c0_8 = arith.constant 0 : index
    %9 = vector.load %arg7[%c0_7, %c0_8] : memref<16x16xf32, #tpu.memory_space<vmem>>, vector<8x8xf32>
    tpu.vector_store %arg7[%c0_7, %c0_8], %8 {strides = array<i32>} : memref<16x16xf32, #tpu.memory_space<vmem>>, vector<8x8xf32>,
    %c1 = arith.constant 1 : index
    %c0_9 = arith.constant 0 : index
    %c0_10 = arith.constant 0 : index
    %10 = vector.load %arg2[%c1, %c0_9, %c0_10] : memref<2x8x8xf32, #tpu.memory_space<vmem>>, vector<1x8x8xf32>
    %11 = vector.shape_cast %10 : vector<1x8x8xf32> to vector<8x8xf32>
    %cst_11 = arith.constant 0.000000e+00 : f32
    %12 = vector.broadcast %cst_11 : f32 to vector<8x8xf32>
    %13 = arith.cmpf ogt, %11, %12 : vector<8x8xf32>
    %cst_12 = arith.constant 0.000000e+00 : f32
    %cst_13 = arith.constant -1.000000e+30 : f32
    %14 = vector.broadcast %cst_12 : f32 to vector<8x8xf32>
    %15 = vector.broadcast %cst_13 : f32 to vector<8x8xf32>
    %16 = arith.select %13, %14, %15 : vector<8x8xi1>, vector<8x8xf32>
    %c8 = arith.constant 8 : index
    %c8_14 = arith.constant 8 : index
    %17 = vector.load %arg7[%c8, %c8_14] : memref<16x16xf32, #tpu.memory_space<vmem>>, vector<8x8xf32>
    tpu.vector_store %arg7[%c8, %c8_14], %16 {strides = array<i32>} : memref<16x16xf32, #tpu.memory_space<vmem>>, vector<8x8xf32>,
    %c0_15 = arith.constant 0 : index
    %c0_16 = arith.constant 0 : index
    %18 = vector.load %arg7[%c0_15, %c0_16] : memref<16x16xf32, #tpu.memory_space<vmem>>, vector<16x16xf32>
    %c0_17 = arith.constant 0 : index
    %c0_18 = arith.constant 0 : index
    %19 = vector.load %arg1[%c0_17, %c0_18] : memref<16x32xf32, #tpu.memory_space<vmem>>, vector<16x32xf32>
    %c0_19 = arith.constant 0 : index
    %c0_20 = arith.constant 0 : index
    %20 = vector.load %arg3[%c0_19, %c0_20] : memref<32x96xf32, #tpu.memory_space<vmem>>, vector<32x96xf32>
    %cst_21 = arith.constant dense<0.000000e+00> : vector<16x96xf32>
    %21 = tpu.matmul %19, %20, %cst_21 {dimension_numbers = #tpu.dot_dimension_numbers<[1], [0], [0], [1], [0, 0, 1, 1], [], []>} : vector<16x32xf32>, vector<32x96xf32>, vector<16x96xf32> -> vector<16x96xf32>
    %22 = vector.extract_strided_slice %21 {offsets = [0, 0], sizes = [16, 8], strides = [1, 1]} : vector<16x96xf32> to vector<16x8xf32>
    %23 = vector.extract_strided_slice %21 {offsets = [0, 32], sizes = [16, 8], strides = [1, 1]} : vector<16x96xf32> to vector<16x8xf32>
    %24 = vector.extract_strided_slice %21 {offsets = [0, 64], sizes = [16, 8], strides = [1, 1]} : vector<16x96xf32> to vector<16x8xf32>
    %cst_22 = arith.constant dense<0.000000e+00> : vector<16x16xf32>
    %25 = tpu.matmul %22, %23, %cst_22 {dimension_numbers = #tpu.dot_dimension_numbers<[1], [1], [0], [0], [0, 0, 1, 0], [], []>} : vector<16x8xf32>, vector<16x8xf32>, vector<16x16xf32> -> vector<16x16xf32>
    %26 = arith.addf %25, %18 : vector<16x16xf32>
    %cst_23 = arith.constant dense<0xFF800000> : vector<16xf32>
    %27 = vector.multi_reduction <maximumf>, %26, %cst_23 [1] : vector<16x16xf32> to vector<16xf32>
    %28 = vector.shape_cast %27 : vector<16xf32> to vector<16x1xf32>
    %29 = vector.broadcast %28 : vector<16x1xf32> to vector<16x16xf32>
    %30 = arith.subf %26, %29 : vector<16x16xf32>
    %31 = math.exp %30 : vector<16x16xf32>
    %cst_24 = arith.constant dense<0.000000e+00> : vector<16xf32>
    %32 = vector.multi_reduction <add>, %31, %cst_24 [1] : vector<16x16xf32> to vector<16xf32>
    %33 = vector.shape_cast %32 : vector<16xf32> to vector<16x1xf32>
    %34 = tpu.reciprocal %33 : vector<16x1xf32> -> vector<16x1xf32>
    %cst_25 = arith.constant dense<0.000000e+00> : vector<16x8xf32>
    %35 = tpu.matmul %31, %24, %cst_25 {dimension_numbers = #tpu.dot_dimension_numbers<[1], [0], [0], [1], [0, 0, 1, 1], [], []>} : vector<16x16xf32>, vector<16x8xf32>, vector<16x8xf32> -> vector<16x8xf32>
    %36 = vector.broadcast %34 : vector<16x1xf32> to vector<16x8xf32>
    %37 = arith.mulf %35, %36 : vector<16x8xf32>
    %38 = vector.extract_strided_slice %21 {offsets = [0, 8], sizes = [16, 8], strides = [1, 1]} : vector<16x96xf32> to vector<16x8xf32>
    %39 = vector.extract_strided_slice %21 {offsets = [0, 40], sizes = [16, 8], strides = [1, 1]} : vector<16x96xf32> to vector<16x8xf32>
    %40 = vector.extract_strided_slice %21 {offsets = [0, 72], sizes = [16, 8], strides = [1, 1]} : vector<16x96xf32> to vector<16x8xf32>
    %cst_26 = arith.constant dense<0.000000e+00> : vector<16x16xf32>
    %41 = tpu.matmul %38, %39, %cst_26 {dimension_numbers = #tpu.dot_dimension_numbers<[1], [1], [0], [0], [0, 0, 1, 0], [], []>} : vector<16x8xf32>, vector<16x8xf32>, vector<16x16xf32> -> vector<16x16xf32>
    %42 = arith.addf %41, %18 : vector<16x16xf32>
    %cst_27 = arith.constant dense<0xFF800000> : vector<16xf32>
    %43 = vector.multi_reduction <maximumf>, %42, %cst_27 [1] : vector<16x16xf32> to vector<16xf32>
    %44 = vector.shape_cast %43 : vector<16xf32> to vector<16x1xf32>
    %45 = vector.broadcast %44 : vector<16x1xf32> to vector<16x16xf32>
    %46 = arith.subf %42, %45 : vector<16x16xf32>
    %47 = math.exp %46 : vector<16x16xf32>
    %cst_28 = arith.constant dense<0.000000e+00> : vector<16xf32>
    %48 = vector.multi_reduction <add>, %47, %cst_28 [1] : vector<16x16xf32> to vector<16xf32>
    %49 = vector.shape_cast %48 : vector<16xf32> to vector<16x1xf32>
    %50 = tpu.reciprocal %49 : vector<16x1xf32> -> vector<16x1xf32>
    %cst_29 = arith.constant dense<0.000000e+00> : vector<16x8xf32>
    %51 = tpu.matmul %47, %40, %cst_29 {dimension_numbers = #tpu.dot_dimension_numbers<[1], [0], [0], [1], [0, 0, 1, 1], [], []>} : vector<16x16xf32>, vector<16x8xf32>, vector<16x8xf32> -> vector<16x8xf32>
    %52 = vector.broadcast %50 : vector<16x1xf32> to vector<16x8xf32>
    %53 = arith.mulf %51, %52 : vector<16x8xf32>
    %54 = vector.extract_strided_slice %21 {offsets = [0, 16], sizes = [16, 8], strides = [1, 1]} : vector<16x96xf32> to vector<16x8xf32>
    %55 = vector.extract_strided_slice %21 {offsets = [0, 48], sizes = [16, 8], strides = [1, 1]} : vector<16x96xf32> to vector<16x8xf32>
    %56 = vector.extract_strided_slice %21 {offsets = [0, 80], sizes = [16, 8], strides = [1, 1]} : vector<16x96xf32> to vector<16x8xf32>
    %cst_30 = arith.constant dense<0.000000e+00> : vector<16x16xf32>
    %57 = tpu.matmul %54, %55, %cst_30 {dimension_numbers = #tpu.dot_dimension_numbers<[1], [1], [0], [0], [0, 0, 1, 0], [], []>} : vector<16x8xf32>, vector<16x8xf32>, vector<16x16xf32> -> vector<16x16xf32>
    %58 = arith.addf %57, %18 : vector<16x16xf32>
    %cst_31 = arith.constant dense<0xFF800000> : vector<16xf32>
    %59 = vector.multi_reduction <maximumf>, %58, %cst_31 [1] : vector<16x16xf32> to vector<16xf32>
    %60 = vector.shape_cast %59 : vector<16xf32> to vector<16x1xf32>
    %61 = vector.broadcast %60 : vector<16x1xf32> to vector<16x16xf32>
    %62 = arith.subf %58, %61 : vector<16x16xf32>
    %63 = math.exp %62 : vector<16x16xf32>
    %cst_32 = arith.constant dense<0.000000e+00> : vector<16xf32>
    %64 = vector.multi_reduction <add>, %63, %cst_32 [1] : vector<16x16xf32> to vector<16xf32>
    %65 = vector.shape_cast %64 : vector<16xf32> to vector<16x1xf32>
    %66 = tpu.reciprocal %65 : vector<16x1xf32> -> vector<16x1xf32>
    %cst_33 = arith.constant dense<0.000000e+00> : vector<16x8xf32>
    %67 = tpu.matmul %63, %56, %cst_33 {dimension_numbers = #tpu.dot_dimension_numbers<[1], [0], [0], [1], [0, 0, 1, 1], [], []>} : vector<16x16xf32>, vector<16x8xf32>, vector<16x8xf32> -> vector<16x8xf32>
    %68 = vector.broadcast %66 : vector<16x1xf32> to vector<16x8xf32>
    %69 = arith.mulf %67, %68 : vector<16x8xf32>
    %70 = vector.extract_strided_slice %21 {offsets = [0, 24], sizes = [16, 8], strides = [1, 1]} : vector<16x96xf32> to vector<16x8xf32>
    %71 = vector.extract_strided_slice %21 {offsets = [0, 56], sizes = [16, 8], strides = [1, 1]} : vector<16x96xf32> to vector<16x8xf32>
    %72 = vector.extract_strided_slice %21 {offsets = [0, 88], sizes = [16, 8], strides = [1, 1]} : vector<16x96xf32> to vector<16x8xf32>
    %cst_34 = arith.constant dense<0.000000e+00> : vector<16x16xf32>
    %73 = tpu.matmul %70, %71, %cst_34 {dimension_numbers = #tpu.dot_dimension_numbers<[1], [1], [0], [0], [0, 0, 1, 0], [], []>} : vector<16x8xf32>, vector<16x8xf32>, vector<16x16xf32> -> vector<16x16xf32>
    %74 = arith.addf %73, %18 : vector<16x16xf32>
    %cst_35 = arith.constant dense<0xFF800000> : vector<16xf32>
    %75 = vector.multi_reduction <maximumf>, %74, %cst_35 [1] : vector<16x16xf32> to vector<16xf32>
    %76 = vector.shape_cast %75 : vector<16xf32> to vector<16x1xf32>
    %77 = vector.broadcast %76 : vector<16x1xf32> to vector<16x16xf32>
    %78 = arith.subf %74, %77 : vector<16x16xf32>
    %79 = math.exp %78 : vector<16x16xf32>
    %cst_36 = arith.constant dense<0.000000e+00> : vector<16xf32>
    %80 = vector.multi_reduction <add>, %79, %cst_36 [1] : vector<16x16xf32> to vector<16xf32>
    %81 = vector.shape_cast %80 : vector<16xf32> to vector<16x1xf32>
    %82 = tpu.reciprocal %81 : vector<16x1xf32> -> vector<16x1xf32>
    %cst_37 = arith.constant dense<0.000000e+00> : vector<16x8xf32>
    %83 = tpu.matmul %79, %72, %cst_37 {dimension_numbers = #tpu.dot_dimension_numbers<[1], [0], [0], [1], [0, 0, 1, 1], [], []>} : vector<16x16xf32>, vector<16x8xf32>, vector<16x8xf32> -> vector<16x8xf32>
    %84 = vector.broadcast %82 : vector<16x1xf32> to vector<16x8xf32>
    %85 = arith.mulf %83, %84 : vector<16x8xf32>
    %86 = vector.extract_strided_slice %37 {offsets = [0, 0], sizes = [8, 8], strides = [1, 1]} : vector<16x8xf32> to vector<8x8xf32>
    %87 = vector.extract_strided_slice %53 {offsets = [0, 0], sizes = [8, 8], strides = [1, 1]} : vector<16x8xf32> to vector<8x8xf32>
    %88 = vector.extract_strided_slice %69 {offsets = [0, 0], sizes = [8, 8], strides = [1, 1]} : vector<16x8xf32> to vector<8x8xf32>
    %89 = vector.extract_strided_slice %85 {offsets = [0, 0], sizes = [8, 8], strides = [1, 1]} : vector<16x8xf32> to vector<8x8xf32>
    %90 = vector.extract_strided_slice %37 {offsets = [8, 0], sizes = [8, 8], strides = [1, 1]} : vector<16x8xf32> to vector<8x8xf32>
    %91 = vector.extract_strided_slice %53 {offsets = [8, 0], sizes = [8, 8], strides = [1, 1]} : vector<16x8xf32> to vector<8x8xf32>
    %92 = vector.extract_strided_slice %69 {offsets = [8, 0], sizes = [8, 8], strides = [1, 1]} : vector<16x8xf32> to vector<8x8xf32>
    %93 = vector.extract_strided_slice %85 {offsets = [8, 0], sizes = [8, 8], strides = [1, 1]} : vector<16x8xf32> to vector<8x8xf32>
    %94 = tpu.concatenate %86, %87, %88, %89, %90, %91, %92, %93 in 0 : vector<8x8xf32>, vector<8x8xf32>, vector<8x8xf32>, vector<8x8xf32>, vector<8x8xf32>, vector<8x8xf32>, vector<8x8xf32>, vector<8x8xf32> -> vector<64x8xf32>
    %95 = vector.shape_cast %94 : vector<64x8xf32> to vector<16x32xf32>
    %c0_38 = arith.constant 0 : index
    %c0_39 = arith.constant 0 : index
    %96 = vector.load %arg4[%c0_38, %c0_39] : memref<32x32xf32, #tpu.memory_space<vmem>>, vector<32x32xf32>
    %cst_40 = arith.constant dense<0.000000e+00> : vector<16x32xf32>
    %97 = tpu.matmul %95, %96, %cst_40 {dimension_numbers = #tpu.dot_dimension_numbers<[1], [0], [0], [1], [0, 0, 1, 1], [], []>} : vector<16x32xf32>, vector<32x32xf32>, vector<16x32xf32> -> vector<16x32xf32>
    %c0_41 = arith.constant 0 : index
    %c0_42 = arith.constant 0 : index
    %98 = vector.load %arg5[%c0_41, %c0_42] : memref<1x32xf32, #tpu.memory_space<vmem>>, vector<1x32xf32>
    %99 = vector.broadcast %98 : vector<1x32xf32> to vector<16x32xf32>
    %100 = arith.addf %97, %99 : vector<16x32xf32>
    %c0_43 = arith.constant 0 : index
    %c0_44 = arith.constant 0 : index
    %101 = vector.load %arg6[%c0_43, %c0_44] : memref<16x32xf32, #tpu.memory_space<vmem>>, vector<16x32xf32>
    tpu.vector_store %arg6[%c0_43, %c0_44], %100 {strides = array<i32>} : memref<16x32xf32, #tpu.memory_space<vmem>>, vector<16x32xf32>,
    return
  }
  func.func @transform_0(%arg0: i32) -> (i32, i32) {
    %c0_i32 = arith.constant 0 : i32
    %c0_i32_0 = arith.constant 0 : i32
    return %arg0, %c0_i32 : i32, i32
  }
  func.func @transform_1(%arg0: i32) -> (i32, i32, i32) {
    %c0_i32 = arith.constant 0 : i32
    %c0_i32_0 = arith.constant 0 : i32
    %c0_i32_1 = arith.constant 0 : i32
    return %arg0, %c0_i32, %c0_i32_0 : i32, i32, i32
  }
  func.func @transform_2(%arg0: i32) -> (i32, i32) {
    %c0_i32 = arith.constant 0 : i32
    %c0_i32_0 = arith.constant 0 : i32
    %c0_i32_1 = arith.constant 0 : i32
    return %c0_i32, %c0_i32_0 : i32, i32
  }
  func.func @transform_3(%arg0: i32) -> (i32, i32) {
    %c0_i32 = arith.constant 0 : i32
    %c0_i32_0 = arith.constant 0 : i32
    %c0_i32_1 = arith.constant 0 : i32
    return %c0_i32, %c0_i32_0 : i32, i32
  }
  func.func @transform_4(%arg0: i32) -> (i32, i32) {
    %c0_i32 = arith.constant 0 : i32
    %c0_i32_0 = arith.constant 0 : i32
    %c0_i32_1 = arith.constant 0 : i32
    return %c0_i32, %c0_i32_0 : i32, i32
  }
  func.func @transform_5(%arg0: i32) -> (i32, i32) {
    %c0_i32 = arith.constant 0 : i32
    %c0_i32_0 = arith.constant 0 : i32
    return %arg0, %c0_i32 : i32, i32
  }
}

module attributes {stable_mosaic.version = 11 : i64} {
  func.func @_fused_mhga_kernel(%arg0: i32, %arg1: memref<16x32xf32, #tpu.memory_space<vmem>>, %arg2: memref<2x8x8xf32, #tpu.memory_space<vmem>>, %arg3: memref<32x96xf32, #tpu.memory_space<vmem>>, %arg4: memref<32x32xf32, #tpu.memory_space<vmem>>, %arg5: memref<1x32xf32, #tpu.memory_space<vmem>>, %arg6: memref<16x32xf32, #tpu.memory_space<vmem>>, %arg7: memref<16x16xf32, #tpu.memory_space<vmem>>) attributes {dimension_semantics = [#tpu.dimension_semantics<parallel>], iteration_bounds = array<i64: 2>, scalar_prefetch = 0 : i64, scratch_operands = 1 : i64, tpu.core_type = #tpu.core_type<tc>, window_params = [{transform_indices = @transform_0, window_bounds = array<i64: 16, 32>}, {transform_indices = @transform_1, window_bounds = array<i64: 2, 8, 8>}, {pipeline_mode = #tpu.pipeline_mode<synchronous>, transform_indices = @transform_2, window_bounds = array<i64: 32, 96>}, {pipeline_mode = #tpu.pipeline_mode<synchronous>, transform_indices = @transform_3, window_bounds = array<i64: 32, 32>}, {pipeline_mode = #tpu.pipeline_mode<synchronous>, transform_indices = @transform_4, window_bounds = array<i64: 1, 32>}, {transform_indices = @transform_5, window_bounds = array<i64: 16, 32>}]} {
    %cst = arith.constant -1.000000e+30 : f32
    %0 = vector.broadcast %cst : f32 to vector<16x16xf32>
    %c0 = arith.constant 0 : index
    %c0_0 = arith.constant 0 : index
    %1 = vector.load %arg7[%c0, %c0_0] : memref<16x16xf32, #tpu.memory_space<vmem>>, vector<16x16xf32>
    tpu.vector_store %arg7[%c0, %c0_0], %0 {strides = array<i32>} : memref<16x16xf32, #tpu.memory_space<vmem>>, vector<16x16xf32>,
    %c0_1 = arith.constant 0 : index
    %c0_2 = arith.constant 0 : index
    %c0_3 = arith.constant 0 : index
    %2 = vector.load %arg2[%c0_1, %c0_2, %c0_3] : memref<2x8x8xf32, #tpu.memory_space<vmem>>, vector<1x8x8xf32>
    %3 = vector.shape_cast %2 : vector<1x8x8xf32> to vector<8x8xf32>
    %cst_4 = arith.constant 0.000000e+00 : f32
    %4 = vector.broadcast %cst_4 : f32 to vector<8x8xf32>
    %5 = arith.cmpf ogt, %3, %4 : vector<8x8xf32>
    %cst_5 = arith.constant 0.000000e+00 : f32
    %cst_6 = arith.constant -1.000000e+30 : f32
    %6 = vector.broadcast %cst_5 : f32 to vector<8x8xf32>
    %7 = vector.broadcast %cst_6 : f32 to vector<8x8xf32>
    %8 = arith.select %5, %6, %7 : vector<8x8xi1>, vector<8x8xf32>
    %c0_7 = arith.constant 0 : index
    %c0_8 = arith.constant 0 : index
    %9 = vector.load %arg7[%c0_7, %c0_8] : memref<16x16xf32, #tpu.memory_space<vmem>>, vector<8x8xf32>
    tpu.vector_store %arg7[%c0_7, %c0_8], %8 {strides = array<i32>} : memref<16x16xf32, #tpu.memory_space<vmem>>, vector<8x8xf32>,
    %c1 = arith.constant 1 : index
    %c0_9 = arith.constant 0 : index
    %c0_10 = arith.constant 0 : index
    %10 = vector.load %arg2[%c1, %c0_9, %c0_10] : memref<2x8x8xf32, #tpu.memory_space<vmem>>, vector<1x8x8xf32>
    %11 = vector.shape_cast %10 : vector<1x8x8xf32> to vector<8x8xf32>
    %cst_11 = arith.constant 0.000000e+00 : f32
    %12 = vector.broadcast %cst_11 : f32 to vector<8x8xf32>
    %13 = arith.cmpf ogt, %11, %12 : vector<8x8xf32>
    %cst_12 = arith.constant 0.000000e+00 : f32
    %cst_13 = arith.constant -1.000000e+30 : f32
    %14 = vector.broadcast %cst_12 : f32 to vector<8x8xf32>
    %15 = vector.broadcast %cst_13 : f32 to vector<8x8xf32>
    %16 = arith.select %13, %14, %15 : vector<8x8xi1>, vector<8x8xf32>
    %c8 = arith.constant 8 : index
    %c8_14 = arith.constant 8 : index
    %17 = vector.load %arg7[%c8, %c8_14] : memref<16x16xf32, #tpu.memory_space<vmem>>, vector<8x8xf32>
    tpu.vector_store %arg7[%c8, %c8_14], %16 {strides = array<i32>} : memref<16x16xf32, #tpu.memory_space<vmem>>, vector<8x8xf32>,
    %c0_15 = arith.constant 0 : index
    %c0_16 = arith.constant 0 : index
    %18 = vector.load %arg7[%c0_15, %c0_16] : memref<16x16xf32, #tpu.memory_space<vmem>>, vector<16x16xf32>
    %c0_17 = arith.constant 0 : index
    %c0_18 = arith.constant 0 : index
    %19 = vector.load %arg1[%c0_17, %c0_18] : memref<16x32xf32, #tpu.memory_space<vmem>>, vector<16x32xf32>
    %c0_19 = arith.constant 0 : index
    %c0_20 = arith.constant 0 : index
    %20 = vector.load %arg3[%c0_19, %c0_20] : memref<32x96xf32, #tpu.memory_space<vmem>>, vector<32x96xf32>
    %cst_21 = arith.constant dense<0.000000e+00> : vector<16x96xf32>
    %21 = tpu.matmul %19, %20, %cst_21 {dimension_numbers = #tpu.dot_dimension_numbers<[1], [0], [0], [1], [0, 0, 1, 1], [], []>} : vector<16x32xf32>, vector<32x96xf32>, vector<16x96xf32> -> vector<16x96xf32>
    %22 = vector.extract_strided_slice %21 {offsets = [0, 0], sizes = [16, 8], strides = [1, 1]} : vector<16x96xf32> to vector<16x8xf32>
    %23 = vector.extract_strided_slice %21 {offsets = [0, 32], sizes = [16, 8], strides = [1, 1]} : vector<16x96xf32> to vector<16x8xf32>
    %24 = vector.extract_strided_slice %21 {offsets = [0, 64], sizes = [16, 8], strides = [1, 1]} : vector<16x96xf32> to vector<16x8xf32>
    %cst_22 = arith.constant dense<0.000000e+00> : vector<16x16xf32>
    %25 = tpu.matmul %22, %23, %cst_22 {dimension_numbers = #tpu.dot_dimension_numbers<[1], [1], [0], [0], [0, 0, 1, 0], [], []>} : vector<16x8xf32>, vector<16x8xf32>, vector<16x16xf32> -> vector<16x16xf32>
    %26 = arith.addf %25, %18 : vector<16x16xf32>
    %cst_23 = arith.constant dense<0xFF800000> : vector<16xf32>
    %27 = vector.multi_reduction <maximumf>, %26, %cst_23 [1] : vector<16x16xf32> to vector<16xf32>
    %28 = vector.shape_cast %27 : vector<16xf32> to vector<16x1xf32>
    %29 = vector.broadcast %28 : vector<16x1xf32> to vector<16x16xf32>
    %30 = arith.subf %26, %29 : vector<16x16xf32>
    %31 = math.exp %30 : vector<16x16xf32>
    %cst_24 = arith.constant dense<0.000000e+00> : vector<16xf32>
    %32 = vector.multi_reduction <add>, %31, %cst_24 [1] : vector<16x16xf32> to vector<16xf32>
    %33 = vector.shape_cast %32 : vector<16xf32> to vector<16x1xf32>
    %34 = tpu.reciprocal %33 : vector<16x1xf32> -> vector<16x1xf32>
    %cst_25 = arith.constant dense<0.000000e+00> : vector<16x8xf32>
    %35 = tpu.matmul %31, %24, %cst_25 {dimension_numbers = #tpu.dot_dimension_numbers<[1], [0], [0], [1], [0, 0, 1, 1], [], []>} : vector<16x16xf32>, vector<16x8xf32>, vector<16x8xf32> -> vector<16x8xf32>
    %36 = vector.broadcast %34 : vector<16x1xf32> to vector<16x8xf32>
    %37 = arith.mulf %35, %36 : vector<16x8xf32>
    %38 = vector.extract_strided_slice %21 {offsets = [0, 8], sizes = [16, 8], strides = [1, 1]} : vector<16x96xf32> to vector<16x8xf32>
    %39 = vector.extract_strided_slice %21 {offsets = [0, 40], sizes = [16, 8], strides = [1, 1]} : vector<16x96xf32> to vector<16x8xf32>
    %40 = vector.extract_strided_slice %21 {offsets = [0, 72], sizes = [16, 8], strides = [1, 1]} : vector<16x96xf32> to vector<16x8xf32>
    %cst_26 = arith.constant dense<0.000000e+00> : vector<16x16xf32>
    %41 = tpu.matmul %38, %39, %cst_26 {dimension_numbers = #tpu.dot_dimension_numbers<[1], [1], [0], [0], [0, 0, 1, 0], [], []>} : vector<16x8xf32>, vector<16x8xf32>, vector<16x16xf32> -> vector<16x16xf32>
    %42 = arith.addf %41, %18 : vector<16x16xf32>
    %cst_27 = arith.constant dense<0xFF800000> : vector<16xf32>
    %43 = vector.multi_reduction <maximumf>, %42, %cst_27 [1] : vector<16x16xf32> to vector<16xf32>
    %44 = vector.shape_cast %43 : vector<16xf32> to vector<16x1xf32>
    %45 = vector.broadcast %44 : vector<16x1xf32> to vector<16x16xf32>
    %46 = arith.subf %42, %45 : vector<16x16xf32>
    %47 = math.exp %46 : vector<16x16xf32>
    %cst_28 = arith.constant dense<0.000000e+00> : vector<16xf32>
    %48 = vector.multi_reduction <add>, %47, %cst_28 [1] : vector<16x16xf32> to vector<16xf32>
    %49 = vector.shape_cast %48 : vector<16xf32> to vector<16x1xf32>
    %50 = tpu.reciprocal %49 : vector<16x1xf32> -> vector<16x1xf32>
    %cst_29 = arith.constant dense<0.000000e+00> : vector<16x8xf32>
    %51 = tpu.matmul %47, %40, %cst_29 {dimension_numbers = #tpu.dot_dimension_numbers<[1], [0], [0], [1], [0, 0, 1, 1], [], []>} : vector<16x16xf32>, vector<16x8xf32>, vector<16x8xf32> -> vector<16x8xf32>
    %52 = vector.broadcast %50 : vector<16x1xf32> to vector<16x8xf32>
    %53 = arith.mulf %51, %52 : vector<16x8xf32>
    %54 = vector.extract_strided_slice %21 {offsets = [0, 16], sizes = [16, 8], strides = [1, 1]} : vector<16x96xf32> to vector<16x8xf32>
    %55 = vector.extract_strided_slice %21 {offsets = [0, 48], sizes = [16, 8], strides = [1, 1]} : vector<16x96xf32> to vector<16x8xf32>
    %56 = vector.extract_strided_slice %21 {offsets = [0, 80], sizes = [16, 8], strides = [1, 1]} : vector<16x96xf32> to vector<16x8xf32>
    %cst_30 = arith.constant dense<0.000000e+00> : vector<16x16xf32>
    %57 = tpu.matmul %54, %55, %cst_30 {dimension_numbers = #tpu.dot_dimension_numbers<[1], [1], [0], [0], [0, 0, 1, 0], [], []>} : vector<16x8xf32>, vector<16x8xf32>, vector<16x16xf32> -> vector<16x16xf32>
    %58 = arith.addf %57, %18 : vector<16x16xf32>
    %cst_31 = arith.constant dense<0xFF800000> : vector<16xf32>
    %59 = vector.multi_reduction <maximumf>, %58, %cst_31 [1] : vector<16x16xf32> to vector<16xf32>
    %60 = vector.shape_cast %59 : vector<16xf32> to vector<16x1xf32>
    %61 = vector.broadcast %60 : vector<16x1xf32> to vector<16x16xf32>
    %62 = arith.subf %58, %61 : vector<16x16xf32>
    %63 = math.exp %62 : vector<16x16xf32>
    %cst_32 = arith.constant dense<0.000000e+00> : vector<16xf32>
    %64 = vector.multi_reduction <add>, %63, %cst_32 [1] : vector<16x16xf32> to vector<16xf32>
    %65 = vector.shape_cast %64 : vector<16xf32> to vector<16x1xf32>
    %66 = tpu.reciprocal %65 : vector<16x1xf32> -> vector<16x1xf32>
    %cst_33 = arith.constant dense<0.000000e+00> : vector<16x8xf32>
    %67 = tpu.matmul %63, %56, %cst_33 {dimension_numbers = #tpu.dot_dimension_numbers<[1], [0], [0], [1], [0, 0, 1, 1], [], []>} : vector<16x16xf32>, vector<16x8xf32>, vector<16x8xf32> -> vector<16x8xf32>
    %68 = vector.broadcast %66 : vector<16x1xf32> to vector<16x8xf32>
    %69 = arith.mulf %67, %68 : vector<16x8xf32>
    %70 = vector.extract_strided_slice %21 {offsets = [0, 24], sizes = [16, 8], strides = [1, 1]} : vector<16x96xf32> to vector<16x8xf32>
    %71 = vector.extract_strided_slice %21 {offsets = [0, 56], sizes = [16, 8], strides = [1, 1]} : vector<16x96xf32> to vector<16x8xf32>
    %72 = vector.extract_strided_slice %21 {offsets = [0, 88], sizes = [16, 8], strides = [1, 1]} : vector<16x96xf32> to vector<16x8xf32>
    %cst_34 = arith.constant dense<0.000000e+00> : vector<16x16xf32>
    %73 = tpu.matmul %70, %71, %cst_34 {dimension_numbers = #tpu.dot_dimension_numbers<[1], [1], [0], [0], [0, 0, 1, 0], [], []>} : vector<16x8xf32>, vector<16x8xf32>, vector<16x16xf32> -> vector<16x16xf32>
    %74 = arith.addf %73, %18 : vector<16x16xf32>
    %cst_35 = arith.constant dense<0xFF800000> : vector<16xf32>
    %75 = vector.multi_reduction <maximumf>, %74, %cst_35 [1] : vector<16x16xf32> to vector<16xf32>
    %76 = vector.shape_cast %75 : vector<16xf32> to vector<16x1xf32>
    %77 = vector.broadcast %76 : vector<16x1xf32> to vector<16x16xf32>
    %78 = arith.subf %74, %77 : vector<16x16xf32>
    %79 = math.exp %78 : vector<16x16xf32>
    %cst_36 = arith.constant dense<0.000000e+00> : vector<16xf32>
    %80 = vector.multi_reduction <add>, %79, %cst_36 [1] : vector<16x16xf32> to vector<16xf32>
    %81 = vector.shape_cast %80 : vector<16xf32> to vector<16x1xf32>
    %82 = tpu.reciprocal %81 : vector<16x1xf32> -> vector<16x1xf32>
    %cst_37 = arith.constant dense<0.000000e+00> : vector<16x8xf32>
    %83 = tpu.matmul %79, %72, %cst_37 {dimension_numbers = #tpu.dot_dimension_numbers<[1], [0], [0], [1], [0, 0, 1, 1], [], []>} : vector<16x16xf32>, vector<16x8xf32>, vector<16x8xf32> -> vector<16x8xf32>
    %84 = vector.broadcast %82 : vector<16x1xf32> to vector<16x8xf32>
    %85 = arith.mulf %83, %84 : vector<16x8xf32>
    %86 = vector.extract_strided_slice %37 {offsets = [0, 0], sizes = [8, 8], strides = [1, 1]} : vector<16x8xf32> to vector<8x8xf32>
    %87 = vector.extract_strided_slice %53 {offsets = [0, 0], sizes = [8, 8], strides = [1, 1]} : vector<16x8xf32> to vector<8x8xf32>
    %88 = vector.extract_strided_slice %69 {offsets = [0, 0], sizes = [8, 8], strides = [1, 1]} : vector<16x8xf32> to vector<8x8xf32>
    %89 = vector.extract_strided_slice %85 {offsets = [0, 0], sizes = [8, 8], strides = [1, 1]} : vector<16x8xf32> to vector<8x8xf32>
    %90 = vector.extract_strided_slice %37 {offsets = [8, 0], sizes = [8, 8], strides = [1, 1]} : vector<16x8xf32> to vector<8x8xf32>
    %91 = vector.extract_strided_slice %53 {offsets = [8, 0], sizes = [8, 8], strides = [1, 1]} : vector<16x8xf32> to vector<8x8xf32>
    %92 = vector.extract_strided_slice %69 {offsets = [8, 0], sizes = [8, 8], strides = [1, 1]} : vector<16x8xf32> to vector<8x8xf32>
    %93 = vector.extract_strided_slice %85 {offsets = [8, 0], sizes = [8, 8], strides = [1, 1]} : vector<16x8xf32> to vector<8x8xf32>
    %94 = tpu.concatenate %86, %87, %88, %89, %90, %91, %92, %93 in 0 : vector<8x8xf32>, vector<8x8xf32>, vector<8x8xf32>, vector<8x8xf32>, vector<8x8xf32>, vector<8x8xf32>, vector<8x8xf32>, vector<8x8xf32> -> vector<64x8xf32>
    %95 = tpu.iota {dimensions = array<i32: 0>} : vector<16x64xi32>
    %96 = tpu.iota {dimensions = array<i32: 1>} : vector<16x64xi32>
    %c4_i32 = arith.constant 4 : i32
    %97 = vector.broadcast %c4_i32 : i32 to vector<16x64xi32>
    %98 = arith.muli %95, %97 : vector<16x64xi32>
    %c0_i32 = arith.constant 0 : i32
    %99 = vector.broadcast %c0_i32 : i32 to vector<16x64xi32>
    %100 = arith.addi %98, %99 : vector<16x64xi32>
    %101 = arith.cmpi eq, %96, %100 : vector<16x64xi32>
    %102 = arith.extui %101 : vector<16x64xi1> to vector<16x64xi32>
    %103 = arith.sitofp %102 : vector<16x64xi32> to vector<16x64xf32>
    %cst_38 = arith.constant dense<0.000000e+00> : vector<16x8xf32>
    %104 = tpu.matmul %103, %94, %cst_38 {dimension_numbers = #tpu.dot_dimension_numbers<[1], [0], [0], [1], [0, 0, 1, 1], [], []>} : vector<16x64xf32>, vector<64x8xf32>, vector<16x8xf32> -> vector<16x8xf32>
    %c4_i32_39 = arith.constant 4 : i32
    %105 = vector.broadcast %c4_i32_39 : i32 to vector<16x64xi32>
    %106 = arith.muli %95, %105 : vector<16x64xi32>
    %c1_i32 = arith.constant 1 : i32
    %107 = vector.broadcast %c1_i32 : i32 to vector<16x64xi32>
    %108 = arith.addi %106, %107 : vector<16x64xi32>
    %109 = arith.cmpi eq, %96, %108 : vector<16x64xi32>
    %110 = arith.extui %109 : vector<16x64xi1> to vector<16x64xi32>
    %111 = arith.sitofp %110 : vector<16x64xi32> to vector<16x64xf32>
    %cst_40 = arith.constant dense<0.000000e+00> : vector<16x8xf32>
    %112 = tpu.matmul %111, %94, %cst_40 {dimension_numbers = #tpu.dot_dimension_numbers<[1], [0], [0], [1], [0, 0, 1, 1], [], []>} : vector<16x64xf32>, vector<64x8xf32>, vector<16x8xf32> -> vector<16x8xf32>
    %c4_i32_41 = arith.constant 4 : i32
    %113 = vector.broadcast %c4_i32_41 : i32 to vector<16x64xi32>
    %114 = arith.muli %95, %113 : vector<16x64xi32>
    %c2_i32 = arith.constant 2 : i32
    %115 = vector.broadcast %c2_i32 : i32 to vector<16x64xi32>
    %116 = arith.addi %114, %115 : vector<16x64xi32>
    %117 = arith.cmpi eq, %96, %116 : vector<16x64xi32>
    %118 = arith.extui %117 : vector<16x64xi1> to vector<16x64xi32>
    %119 = arith.sitofp %118 : vector<16x64xi32> to vector<16x64xf32>
    %cst_42 = arith.constant dense<0.000000e+00> : vector<16x8xf32>
    %120 = tpu.matmul %119, %94, %cst_42 {dimension_numbers = #tpu.dot_dimension_numbers<[1], [0], [0], [1], [0, 0, 1, 1], [], []>} : vector<16x64xf32>, vector<64x8xf32>, vector<16x8xf32> -> vector<16x8xf32>
    %c4_i32_43 = arith.constant 4 : i32
    %121 = vector.broadcast %c4_i32_43 : i32 to vector<16x64xi32>
    %122 = arith.muli %95, %121 : vector<16x64xi32>
    %c3_i32 = arith.constant 3 : i32
    %123 = vector.broadcast %c3_i32 : i32 to vector<16x64xi32>
    %124 = arith.addi %122, %123 : vector<16x64xi32>
    %125 = arith.cmpi eq, %96, %124 : vector<16x64xi32>
    %126 = arith.extui %125 : vector<16x64xi1> to vector<16x64xi32>
    %127 = arith.sitofp %126 : vector<16x64xi32> to vector<16x64xf32>
    %cst_44 = arith.constant dense<0.000000e+00> : vector<16x8xf32>
    %128 = tpu.matmul %127, %94, %cst_44 {dimension_numbers = #tpu.dot_dimension_numbers<[1], [0], [0], [1], [0, 0, 1, 1], [], []>} : vector<16x64xf32>, vector<64x8xf32>, vector<16x8xf32> -> vector<16x8xf32>
    %129 = tpu.concatenate %104, %112, %120, %128 in 1 : vector<16x8xf32>, vector<16x8xf32>, vector<16x8xf32>, vector<16x8xf32> -> vector<16x32xf32>
    %c0_45 = arith.constant 0 : index
    %c0_46 = arith.constant 0 : index
    %130 = vector.load %arg4[%c0_45, %c0_46] : memref<32x32xf32, #tpu.memory_space<vmem>>, vector<32x32xf32>
    %cst_47 = arith.constant dense<0.000000e+00> : vector<16x32xf32>
    %131 = tpu.matmul %129, %130, %cst_47 {dimension_numbers = #tpu.dot_dimension_numbers<[1], [0], [0], [1], [0, 0, 1, 1], [], []>} : vector<16x32xf32>, vector<32x32xf32>, vector<16x32xf32> -> vector<16x32xf32>
    %c0_48 = arith.constant 0 : index
    %c0_49 = arith.constant 0 : index
    %132 = vector.load %arg5[%c0_48, %c0_49] : memref<1x32xf32, #tpu.memory_space<vmem>>, vector<1x32xf32>
    %133 = vector.broadcast %132 : vector<1x32xf32> to vector<16x32xf32>
    %134 = arith.addf %131, %133 : vector<16x32xf32>
    %c0_50 = arith.constant 0 : index
    %c0_51 = arith.constant 0 : index
    %135 = vector.load %arg6[%c0_50, %c0_51] : memref<16x32xf32, #tpu.memory_space<vmem>>, vector<16x32xf32>
    tpu.vector_store %arg6[%c0_50, %c0_51], %134 {strides = array<i32>} : memref<16x32xf32, #tpu.memory_space<vmem>>, vector<16x32xf32>,
    return
  }
  func.func @transform_0(%arg0: i32) -> (i32, i32) {
    %c0_i32 = arith.constant 0 : i32
    %c0_i32_0 = arith.constant 0 : i32
    return %arg0, %c0_i32 : i32, i32
  }
  func.func @transform_1(%arg0: i32) -> (i32, i32, i32) {
    %c0_i32 = arith.constant 0 : i32
    %c0_i32_0 = arith.constant 0 : i32
    %c0_i32_1 = arith.constant 0 : i32
    return %arg0, %c0_i32, %c0_i32_0 : i32, i32, i32
  }
  func.func @transform_2(%arg0: i32) -> (i32, i32) {
    %c0_i32 = arith.constant 0 : i32
    %c0_i32_0 = arith.constant 0 : i32
    %c0_i32_1 = arith.constant 0 : i32
    return %c0_i32, %c0_i32_0 : i32, i32
  }
  func.func @transform_3(%arg0: i32) -> (i32, i32) {
    %c0_i32 = arith.constant 0 : i32
    %c0_i32_0 = arith.constant 0 : i32
    %c0_i32_1 = arith.constant 0 : i32
    return %c0_i32, %c0_i32_0 : i32, i32
  }
  func.func @transform_4(%arg0: i32) -> (i32, i32) {
    %c0_i32 = arith.constant 0 : i32
    %c0_i32_0 = arith.constant 0 : i32
    %c0_i32_1 = arith.constant 0 : i32
    return %c0_i32, %c0_i32_0 : i32, i32
  }
  func.func @transform_5(%arg0: i32) -> (i32, i32) {
    %c0_i32 = arith.constant 0 : i32
    %c0_i32_0 = arith.constant 0 : i32
    return %arg0, %c0_i32 : i32, i32
  }
}

</mosaic_0001>

<llo_original>
// kernel: tpu_custom_call.1
$region0: #{tpu_custom_call.1}
  #allocation0 [shape = 'u32[]', space=smem, size = 0x4, offset = 0x4, fixed_abs, tag = 'smem constant byte address 0x4 - core index']
  #allocation1 [shape = 'u32[144,128]{1,0:T(1,128)}', space=vmem, size = 0x12000, scoped, tag = 'internal scratch']
  #allocation2 [shape = 'f32[16,16]{1,0:T(8,128)}', space=vmem, size = 0x2000, scoped, tag = 'scratch operand']
  %s0 = inlined_call_operand.hbm [shape: f32[32,32], index: 0, kind: input, shape index: {}]
  %s1 = inlined_call_operand.hbm [shape: f32[4,8,8], index: 1, kind: input, shape index: {}]
  %s2 = inlined_call_operand.hbm [shape: f32[32,96], index: 2, kind: input, shape index: {}]
  %s3 = inlined_call_operand.hbm [shape: f32[32,32], index: 3, kind: input, shape index: {}]
  %s4 = inlined_call_operand.vmem [shape: f32[1,32], index: 4, kind: input, shape index: {}]
  %s5 = inlined_call_operand.hbm [shape: f32[32,32], index: 5, kind: output, shape index: {}]
  %s6 = sld [smem:[#allocation0]]
  $region69: #{tpu_custom_call.1} parent=0
    _
  %s8 = ssub.s32 1, %s6
  %s9 = scalar_select 0, %s8, %s6
  $region1: #{tpu_custom_call.1} parent=0
    #allocation3 [shape = 'u8[16384]{0}', space=vmem, size = 0x4000, scoped, tag = 'input window, operand 0']
    #allocation4 [shape = 's32[2]{0}', space=sflag, size = 0x8, scoped, tag = 'scoped memory for tpu_custom_call.1']
    #allocation5 [shape = 's32[2]{0}', space=sflag, size = 0x8, scoped, tag = 'scoped memory for tpu_custom_call.1']
    #allocation6 [shape = 'u8[16384]{0}', space=vmem, size = 0x4000, scoped, tag = 'input window, operand 1']
    #allocation7 [shape = 's32[2]{0}', space=sflag, size = 0x8, scoped, tag = 'scoped memory for tpu_custom_call.1']
    #allocation8 [shape = 'u8[16384]{0}', space=vmem, size = 0x4000, scoped, tag = 'input window, operand 2, single buffered']
    #allocation9 [shape = 'u8[16384]{0}', space=vmem, size = 0x4000, scoped, tag = 'input window, operand 3, single buffered']
    #allocation10 [shape = 's32[1]{0}', space=sflag, size = 0x4, scoped, tag = 'scoped memory for tpu_custom_call.1']
    #allocation11 [shape = 'u8[16384]{0}', space=vmem, size = 0x4000, scoped, tag = 'output window, operand 0']
    %10 = vsyncpa [#allocation4], 0
    %s11 = scalar_lea.sflag [#allocation4], 1
    %12 = vsyncpa %s11, 0
    %13 = vsyncpa [#allocation7], 0
    %s14 = scalar_lea.sflag [#allocation7], 1
    %15 = vsyncpa %s14, 0
    %16 = vsyncpa [#allocation10], 0
    %17 = vsyncpa [#allocation5], 0
    %s18 = scalar_lea.sflag [#allocation5], 1
    %19 = vsyncpa %s18, 0
    loop: start=0, step=1, limit=4
    $region2: #{tpu_custom_call.1} parent=1 // loop_pre_header
      _
    $region3: #{tpu_custom_call.1} parent=1 // loop_header
      %s21 = sphi 0, %s25
      %p22 = scmp.ge.s32.totalorder %s21, 4
      %s31 = sphi 0, %s33
      %s34 = sphi 0, %s31
      %s35 = sphi 0, %s34
      %s51 = sphi 0, %s35
      %s57 = sphi 0, %s59
      %s60 = sphi 0, %s57
      %s61 = sphi 0, %s60
      %s77 = sphi 0, %s61
      %s81 = sphi 0, %s81
      %s83 = sphi 0, %s81
      %s84 = sphi 0, %s83
      %s98 = sphi 0, %s84
      %s102 = sphi 0, %s102
      %s104 = sphi 0, %s102
      %s105 = sphi 0, %s104
      %s119 = sphi 0, %s105
      %s123 = sphi 0, %s123
      %s125 = sphi 0, %s123
      %s126 = sphi 0, %s125
      %s140 = sphi 0, %s126
      %s146 = sphi 0, %s148
      %s149 = sphi 0, %s146
      %s150 = sphi 0, %s149
      %s166 = sphi 0, %s150
    $region4: #{tpu_custom_call.1} parent=1 // loop_header_branch
      %24 = sbr.rel (%p22) target = $region8
    $region5: #{tpu_custom_call.1} parent=1 // loop_body
      %s26 = ssub.s32 %s21, 1
      %s27 = ssub.s32 %s21, 2
      %s28 = sadd.s32 %s21, 1
      %s29 = ssub.s32 %s21, %s28
      %p30 = scmp.eq.s32.totalorder %s29, 0
      %s32 = sadd.s32 %s31, 1
      %s33 = scalar_select %p30, %s31, %s32
      %p36 = pneg %p30
      %p37 = scmp.eq.s32.totalorder %s21, 1
      %p38 = por %p36, %p37
      %p39 = scmp.ne.s32.totalorder %s31, %s34
      %p40 = scmp.eq.s32.totalorder %s21, 0
      %p41 = por %p39, %p40
      %p42 = scmp.ne.s32.totalorder %s31, %s34
      %p43 = scmp.eq.s32.totalorder %s26, 1
      %p44 = por %p42, %p43
      %p45 = scmp.ne.s32.totalorder %s34, %s35
      %p46 = scmp.eq.s32.totalorder %s26, 0
      %p47 = por %p45, %p46
      %p48 = scmp.ne.s32.totalorder %s34, %s35
      %p49 = scmp.eq.s32.totalorder %s27, 1
      %p50 = por %p48, %p49
      %p52 = scmp.ne.s32.totalorder %s35, %s51
      %p53 = scmp.eq.s32.totalorder %s27, 0
      %p54 = por %p52, %p53
      %s55 = ssub.s32 %s21, %s28
      %p56 = scmp.eq.s32.totalorder %s55, 0
      %s58 = sadd.s32 %s57, 1
      %s59 = scalar_select %p56, %s57, %s58
      %p62 = pneg %p56
      %p63 = scmp.eq.s32.totalorder %s21, 1
      %p64 = por %p62, %p63
      %p65 = scmp.ne.s32.totalorder %s57, %s60
      %p66 = scmp.eq.s32.totalorder %s21, 0
      %p67 = por %p65, %p66
      %p68 = scmp.ne.s32.totalorder %s57, %s60
      %p69 = scmp.eq.s32.totalorder %s26, 1
      %p70 = por %p68, %p69
      %p71 = scmp.ne.s32.totalorder %s60, %s61
      %p72 = scmp.eq.s32.totalorder %s26, 0
      %p73 = por %p71, %p72
      %p74 = scmp.ne.s32.totalorder %s60, %s61
      %p75 = scmp.eq.s32.totalorder %s27, 1
      %p76 = por %p74, %p75
      %p78 = scmp.ne.s32.totalorder %s61, %s77
      %p79 = scmp.eq.s32.totalorder %s27, 0
      %p80 = por %p78, %p79
      %s82 = sadd.s32 %s81, 1
      %p85 = scmp.eq.s32.totalorder %s21, 1
      %p86 = scmp.ne.s32.totalorder %s81, %s83
      %p87 = scmp.eq.s32.totalorder %s21, 0
      %p88 = por %p86, %p87
      %p89 = scmp.ne.s32.totalorder %s81, %s83
      %p90 = scmp.eq.s32.totalorder %s26, 1
      %p91 = por %p89, %p90
      %p92 = scmp.ne.s32.totalorder %s83, %s84
      %p93 = scmp.eq.s32.totalorder %s26, 0
      %p94 = por %p92, %p93
      %p95 = scmp.ne.s32.totalorder %s83, %s84
      %p96 = scmp.eq.s32.totalorder %s27, 1
      %p97 = por %p95, %p96
      %p99 = scmp.ne.s32.totalorder %s84, %s98
      %p100 = scmp.eq.s32.totalorder %s27, 0
      %p101 = por %p99, %p100
      %s103 = sadd.s32 %s102, 1
      %p106 = scmp.eq.s32.totalorder %s21, 1
      %p107 = scmp.ne.s32.totalorder %s102, %s104
      %p108 = scmp.eq.s32.totalorder %s21, 0
      %p109 = por %p107, %p108
      %p110 = scmp.ne.s32.totalorder %s102, %s104
      %p111 = scmp.eq.s32.totalorder %s26, 1
      %p112 = por %p110, %p111
      %p113 = scmp.ne.s32.totalorder %s104, %s105
      %p114 = scmp.eq.s32.totalorder %s26, 0
      %p115 = por %p113, %p114
      %p116 = scmp.ne.s32.totalorder %s104, %s105
      %p117 = scmp.eq.s32.totalorder %s27, 1
      %p118 = por %p116, %p117
      %p120 = scmp.ne.s32.totalorder %s105, %s119
      %p121 = scmp.eq.s32.totalorder %s27, 0
      %p122 = por %p120, %p121
      %s124 = sadd.s32 %s123, 1
      %p127 = scmp.eq.s32.totalorder %s21, 1
      %p128 = scmp.ne.s32.totalorder %s123, %s125
      %p129 = scmp.eq.s32.totalorder %s21, 0
      %p130 = por %p128, %p129
      %p131 = scmp.ne.s32.totalorder %s123, %s125
      %p132 = scmp.eq.s32.totalorder %s26, 1
      %p133 = por %p131, %p132
      %p134 = scmp.ne.s32.totalorder %s125, %s126
      %p135 = scmp.eq.s32.totalorder %s26, 0
      %p136 = por %p134, %p135
      %p137 = scmp.ne.s32.totalorder %s125, %s126
      %p138 = scmp.eq.s32.totalorder %s27, 1
      %p139 = por %p137, %p138
      %p141 = scmp.ne.s32.totalorder %s126, %s140
      %p142 = scmp.eq.s32.totalorder %s27, 0
      %p143 = por %p141, %p142
      %s144 = ssub.s32 %s21, %s28
      %p145 = scmp.eq.s32.totalorder %s144, 0
      %s147 = sadd.s32 %s146, 1
      %s148 = scalar_select %p145, %s146, %s147
      %p151 = pneg %p145
      %p152 = scmp.eq.s32.totalorder %s21, 1
      %p153 = por %p151, %p152
      %p154 = scmp.ne.s32.totalorder %s146, %s149
      %p155 = scmp.eq.s32.totalorder %s21, 0
      %p156 = por %p154, %p155
      %p157 = scmp.ne.s32.totalorder %s146, %s149
      %p158 = scmp.eq.s32.totalorder %s26, 1
      %p159 = por %p157, %p158
      %p160 = scmp.ne.s32.totalorder %s149, %s150
      %p161 = scmp.eq.s32.totalorder %s26, 0
      %p162 = por %p160, %p161
      %p163 = scmp.ne.s32.totalorder %s149, %s150
      %p164 = scmp.eq.s32.totalorder %s27, 1
      %p165 = por %p163, %p164
      %p167 = scmp.ne.s32.totalorder %s150, %s166
      %p168 = scmp.eq.s32.totalorder %s27, 0
      %p169 = por %p167, %p168
      %p170 = scmp.le.s32.totalorder 1, %s21
      %p171 = scmp.lt.s32.totalorder %s21, 3
      %p172 = pnand %p170, %p171
      %p173 = pneg %p172
      // Predicated region
      $region9: #{tpu_custom_call.1} parent=5 // pred_check
        _
      $region10: #{tpu_custom_call.1} parent=5 // pred_check_branch
        %175 = sbr.rel (%p172) target = $region12
      $region11: #{tpu_custom_call.1} parent=5 // pred_region
        %s176 = ssub.s32 %s21, 1
        // Predicated region
        $region13: #{tpu_custom_call.1} parent=11 // pred_check
          %p177 = pneg %p94
        $region14: #{tpu_custom_call.1} parent=11 // pred_check_branch
          %179 = sbr.rel (%p177) target = $region16
        $region15: #{tpu_custom_call.1} parent=11 // pred_region
          %s181 = ssub.s32 512, 512
          %182 = vsyncadd [#allocation7], %s181
          %s183 = sshll.u32 [#allocation8], 4
          %s184 = int_to_ptr.vmem [resolvable:$true] %s183
          %189 = dma.hbm_to_vmem [thread:$0]  %s2, 512, %s184, [#allocation7], 128, 128, 8
        $region16: #{tpu_custom_call.1} parent=11 // pred_fallthru
          _
        // Predicated region
        $region17: #{tpu_custom_call.1} parent=11 // pred_check
          %p190 = pneg %p115
        $region18: #{tpu_custom_call.1} parent=11 // pred_check_branch
          %192 = sbr.rel (%p190) target = $region20
        $region19: #{tpu_custom_call.1} parent=11 // pred_region
          %s194 = ssub.s32 512, 512
          %195 = vsyncadd [#allocation10], %s194
          %s196 = sshll.u32 [#allocation9], 4
          %s197 = int_to_ptr.vmem [resolvable:$true] %s196
          %202 = dma.hbm_to_vmem [thread:$0]  %s3, 512, %s197, [#allocation10], 128, 128, 8
        $region20: #{tpu_custom_call.1} parent=11 // pred_fallthru
          _
        // Predicated region
        $region21: #{tpu_custom_call.1} parent=11 // pred_check
          %p203 = pneg %p136
        $region22: #{tpu_custom_call.1} parent=11 // pred_check_branch
          %205 = sbr.rel (%p203) target = $region24
        $region23: #{tpu_custom_call.1} parent=11 // pred_region
          _
        $region24: #{tpu_custom_call.1} parent=11 // pred_fallthru
          _
      $region12: #{tpu_custom_call.1} parent=5 // pred_fallthru
        _
      %p206 = scmp.lt.s32.totalorder %s21, 2
      // Predicated region
      $region25: #{tpu_custom_call.1} parent=5 // pred_check
        %p207 = pneg %p206
      $region26: #{tpu_custom_call.1} parent=5 // pred_check_branch
        %209 = sbr.rel (%p207) target = $region28
      $region27: #{tpu_custom_call.1} parent=5 // pred_region
        // Predicated region
        $region29: #{tpu_custom_call.1} parent=27 // pred_check
          %p210 = pneg %p41
        $region30: #{tpu_custom_call.1} parent=27 // pred_check_branch
          %212 = sbr.rel (%p210) target = $region32
        $region31: #{tpu_custom_call.1} parent=27 // pred_region
          %s213 = sand.u32 %s31, 1
          %s214 = scalar_lea.sflag [#allocation4], %s213
          %s215 = sand.u32 %s31, 1
          %s216 = smul.addr %s215, 16
          %s217 = scalar_lea.vmem [#allocation3], %s216
          %s218 = smul.u32 2, %s21
          %s220 = ssub.s32 256, 256
          %221 = vsyncadd %s214, %s220
          %s222 = smul.addr %s218, 128
          %s223 = scalar_lea.hbm %s0, %s222
          %s224 = sshll.u32 %s217, 4
          %s225 = int_to_ptr.vmem [resolvable:$true] %s224
          %230 = dma.hbm_to_vmem [thread:$0]  %s223, 256, %s225, %s214, 128, 128, 8
        $region32: #{tpu_custom_call.1} parent=27 // pred_fallthru
          _
        // Predicated region
        $region33: #{tpu_custom_call.1} parent=27 // pred_check
          %p231 = pneg %p67
        $region34: #{tpu_custom_call.1} parent=27 // pred_check_branch
          %233 = sbr.rel (%p231) target = $region36
        $region35: #{tpu_custom_call.1} parent=27 // pred_region
          %s234 = sand.u32 %s21, 1
          %s235 = scalar_lea.sflag [#allocation7], %s234
          %s236 = sand.u32 %s57, 1
          %s237 = smul.addr %s236, 16
          %s238 = scalar_lea.vmem [#allocation6], %s237
          %s239 = smul.u32 2, %s21
          %s241 = ssub.s32 256, 256
          %242 = vsyncadd %s235, %s241
          %s243 = smul.addr %s239, 128
          %s244 = scalar_lea.hbm %s1, %s243
          %s245 = sshll.u32 %s238, 4
          %s246 = int_to_ptr.vmem [resolvable:$true] %s245
          %251 = dma.hbm_to_vmem [thread:$0]  %s244, 256, %s246, %s235, 128, 128, 8
        $region36: #{tpu_custom_call.1} parent=27 // pred_fallthru
          _
      $region28: #{tpu_custom_call.1} parent=5 // pred_fallthru
        _
      %p252 = scmp.le.s32.totalorder 1, %s21
      %p253 = scmp.lt.s32.totalorder %s21, 3
      %p254 = pnand %p252, %p253
      %p255 = pneg %p254
      // Predicated region
      $region37: #{tpu_custom_call.1} parent=5 // pred_check
        _
      $region38: #{tpu_custom_call.1} parent=5 // pred_check_branch
        %257 = sbr.rel (%p254) target = $region40
      $region39: #{tpu_custom_call.1} parent=5 // pred_region
        %s258 = ssub.s32 %s21, 1
        %s259 = sand.u32 %s34, 1
        %s260 = scalar_lea.sflag [#allocation4], %s259
        %s261 = sand.u32 %s34, 1
        %s262 = smul.addr %s261, 16
        %s263 = scalar_lea.vmem [#allocation3], %s262
        // Predicated region
        $region41: #{tpu_custom_call.1} parent=39 // pred_check
          %p264 = pneg %p47
        $region42: #{tpu_custom_call.1} parent=39 // pred_check_branch
          %266 = sbr.rel (%p264) target = $region44
        $region43: #{tpu_custom_call.1} parent=39 // pred_region
          %267 = dma.done %s260, 256
        $region44: #{tpu_custom_call.1} parent=39 // pred_fallthru
          _
        %s268 = sand.u32 %s26, 1
        %s269 = scalar_lea.sflag [#allocation7], %s268
        %s270 = sand.u32 %s60, 1
        %s271 = smul.addr %s270, 16
        %s272 = scalar_lea.vmem [#allocation6], %s271
        // Predicated region
        $region45: #{tpu_custom_call.1} parent=39 // pred_check
          %p273 = pneg %p73
        $region46: #{tpu_custom_call.1} parent=39 // pred_check_branch
          %275 = sbr.rel (%p273) target = $region48
        $region47: #{tpu_custom_call.1} parent=39 // pred_region
          %276 = dma.done %s269, 256
        $region48: #{tpu_custom_call.1} parent=39 // pred_fallthru
          _
        // Predicated region
        $region49: #{tpu_custom_call.1} parent=39 // pred_check
          %p277 = pneg %p94
        $region50: #{tpu_custom_call.1} parent=39 // pred_check_branch
          %279 = sbr.rel (%p277) target = $region52
        $region51: #{tpu_custom_call.1} parent=39 // pred_region
          %280 = dma.done [#allocation7], 512
        $region52: #{tpu_custom_call.1} parent=39 // pred_fallthru
          _
        // Predicated region
        $region53: #{tpu_custom_call.1} parent=39 // pred_check
          %p281 = pneg %p115
        $region54: #{tpu_custom_call.1} parent=39 // pred_check_branch
          %283 = sbr.rel (%p281) target = $region56
        $region55: #{tpu_custom_call.1} parent=39 // pred_region
          %284 = dma.done [#allocation10], 512
        $region56: #{tpu_custom_call.1} parent=39 // pred_fallthru
          _
        %s285 = sand.u32 %s34, 1
        %s286 = scalar_lea.sflag [#allocation4], %s285
        %s287 = sand.u32 %s34, 1
        %s288 = smul.addr %s287, 16
        %s289 = scalar_lea.vmem [#allocation3], %s288
        %p290 = pneg %p47
        %p291 = pneg %p44
        %s292 = sand.u32 %s26, 1
        %s293 = scalar_lea.sflag [#allocation7], %s292
        %s294 = sand.u32 %s60, 1
        %s295 = smul.addr %s294, 16
        %s296 = scalar_lea.vmem [#allocation6], %s295
        %p297 = pneg %p73
        %p298 = pneg %p70
        %p299 = pneg %p94
        %p300 = pneg %p91
        %p301 = pneg %p115
        %p302 = pneg %p112
        %p303 = pneg %p136
        %p304 = pneg %p133
        %p305 = pneg %p162
        %p306 = pneg %p159
        %s307 = sand.u32 %s149, 1
        %s308 = scalar_lea.sflag [#allocation5], %s307
        %s309 = sand.u32 %s149, 1
        %s310 = smul.addr %s309, 16
        %s311 = scalar_lea.vmem [#allocation11], %s310
        %s312 = smul.u32 2, %s26
        %s313 = smul.u32 2, %s26
        %s314 = smul.u32 2, %s26
        %vm315 = vcmask 130048
        %316 = vst.msk [vmem:[#allocation2] sm:$0xff] %vm315, -1e+30
        %317 = vst.msk [vmem:[#allocation2 + $0x8] sm:$0xff] %vm315, -1e+30
        %v318 = vld [vmem:[%s272] sm:$0xff]
        %vm319 = vcmp.gt.f32.partialorder %v318, 0.0
        %v320 = vsel %vm319, 0.0, -1e+30
        %vm321 = vcmask 64512
        %322 = vst.msk [vmem:[#allocation2] sm:$0xff] %vm321, %v320
        %s323 = scalar_lea.vmem %s272, 8 [#allocation6]
        %v324 = vld [vmem:[%s323] sm:$0xff]
        %vm325 = vcmp.gt.f32.partialorder %v324, 0.0
        %v326 = vsel %vm325, 0.0, -1e+30
        %328 = vrot.lane.b32.xlu0 %v326, 8
        %v329 = vpop.permute.xlu0 %328
        %vm331 = vcmask 130112
        %332 = vst.msk [vmem:[#allocation2 + $0x8] sm:$0xff] %vm331, %v329
        %v333 = vld [vmem:[#allocation2] sm:$0xff]
        %v334 = vld [vmem:[#allocation2 + $0x8] sm:$0xff]
        %v335 = vld [vmem:[%s263] sm:$0xff]
        %v336 = vld [vmem:[%s263 + $0x8] sm:$0xff]
        %v337 = vld [vmem:[#allocation8] sm:$0xff]
        %v338 = vld [vmem:[#allocation8 + $0x8] sm:$0xff]
        %v339 = vld [vmem:[#allocation8 + $0x10] sm:$0xff]
        %v340 = vld [vmem:[#allocation8 + $0x18] sm:$0xff]
        %vm341 = vcmask 261120
        %v343 = vsel %vm341, %v335, 0
        %v346 = vsel %vm341, %v336, 0
        %348 = vmatprep.subr.mxu0 0.0
        %349 = vmatpush1.msra.mxu0 0.0
        %350 = vmatprep.subr.mxu0 0.0
        %351 = vmatpush1.msra.mxu0 0.0
        %352 = vmatprep.subr.mxu0 0.0
        %353 = vmatpush1.msra.mxu0 0.0
        %354 = vmatprep.subr.mxu0 0.0
        %355 = vmatpush1.msra.mxu0 0.0
        %356 = vmatprep.subr.mxu0 0.0
        %357 = vmatpush1.msra.mxu0 0.0
        %358 = vmatprep.subr.mxu0 0.0
        %359 = vmatpush1.msra.mxu0 0.0
        %360 = vmatprep.subr.mxu0 0.0
        %361 = vmatpush1.msra.mxu0 0.0
        %362 = vmatprep.subr.mxu0 0.0
        %363 = vmatpush1.msra.mxu0 0.0
        %364 = vmatprep.subr.mxu0 0.0
        %365 = vmatpush1.msra.mxu0 0.0
        %366 = vmatprep.subr.mxu0 0.0
        %367 = vmatpush1.msra.mxu0 0.0
        %368 = vmatprep.subr.mxu0 0.0
        %369 = vmatpush1.msra.mxu0 0.0
        %370 = vmatprep.subr.mxu0 0.0
        %371 = vmatpush1.msra.mxu0 0.0
        %372 = vmatprep.subr.mxu0 0.0
        %373 = vmatpush1.msra.mxu0 %v340
        %374 = vmatprep.subr.mxu0 0.0
        %375 = vmatpush1.msra.mxu0 %v339
        %376 = vmatprep.subr.mxu0 0.0
        %377 = vmatpush1.msra.mxu0 %v338
        %378 = vmatprep.subr.mxu0 0.0
        %379 = vmatpush1.msra.mxu0 %v337
        %380 = vmatprep.subr.mxu0 0.0
        %381 = vmatpush2.msra.mxu0 0.0
        %382 = vmatprep.subr.mxu0 0.0
        %383 = vmatpush2.msra.mxu0 0.0
        %384 = vmatprep.subr.mxu0 0.0
        %385 = vmatpush2.msra.mxu0 0.0
        %386 = vmatprep.subr.mxu0 0.0
        %387 = vmatpush2.msra.mxu0 0.0
        %388 = vmatprep.subr.mxu0 0.0
        %389 = vmatpush2.msra.mxu0 0.0
        %390 = vmatprep.subr.mxu0 0.0
        %391 = vmatpush2.msra.mxu0 0.0
        %392 = vmatprep.subr.mxu0 0.0
        %393 = vmatpush2.msra.mxu0 0.0
        %394 = vmatprep.subr.mxu0 0.0
        %395 = vmatpush2.msra.mxu0 0.0
        %396 = vmatprep.subr.mxu0 0.0
        %397 = vmatpush2.msra.mxu0 0.0
        %398 = vmatprep.subr.mxu0 0.0
        %399 = vmatpush2.msra.mxu0 0.0
        %400 = vmatprep.subr.mxu0 0.0
        %401 = vmatpush2.msra.mxu0 0.0
        %402 = vmatprep.subr.mxu0 0.0
        %403 = vmatpush2.msra.mxu0 0.0
        %404 = vmatprep.subr.mxu0 0.0
        %405 = vmatpush2.msra.mxu0 0.0
        %406 = vmatprep.subr.mxu0 0.0
        %407 = vmatpush2.msra.mxu0 0.0
        %408 = vmatprep.subr.mxu0 0.0
        %409 = vmatpush2.msra.mxu0 0.0
        %410 = vmatprep.subr.mxu0 0.0
        %411 = vmatpush2.msra.mxu0 0.0
        %412 = vmatprep.mubr.f32.mxu0 0.0
        %413 = vmatmul.mubr.f32.gmra.mxu0 %v343
        %v414 = vpop.f32.mrf.mxu0
        %v415 = vadd.f32 0.0, %v414
        %v416 = vpop.f32.mrf.mxu0
        %417 = vmatprep.mubr.f32.mxu0 0.0
        %418 = vmatmul.mubr.f32.gmra.mxu0 %v346
        %v419 = vpop.f32.mrf.mxu0
        %v420 = vadd.f32 0.0, %v419
        %v421 = vpop.f32.mrf.mxu0
        %422 = vdwg.mxu0
        %425 = vrot.lane.b32.xlu0 %v415, 96
        %v426 = vpop.permute.xlu0 %425
        %427 = vrot.lane.b32.xlu0 %v420, 96
        %v428 = vpop.permute.xlu0 %427
        %v429 = vsel %vm321, %v415, 0
        %v431 = vsel %vm321, %v420, 0
        %v433 = vsel %vm321, %v426, 0
        %v435 = vsel %vm321, %v428, 0
        %437 = vmatprep.subr.mxu0 0.0
        %438 = vmatpush1.xpose.msra.mxu0 0.0
        %439 = vmatprep.subr.mxu0 0.0
        %440 = vmatpush1.xpose.msra.mxu0 0.0
        %441 = vmatprep.subr.mxu0 0.0
        %442 = vmatpush1.xpose.msra.mxu0 0.0
        %443 = vmatprep.subr.mxu0 0.0
        %444 = vmatpush1.xpose.msra.mxu0 0.0
        %445 = vmatprep.subr.mxu0 0.0
        %446 = vmatpush1.xpose.msra.mxu0 0.0
        %447 = vmatprep.subr.mxu0 0.0
        %448 = vmatpush1.xpose.msra.mxu0 0.0
        %449 = vmatprep.subr.mxu0 0.0
        %450 = vmatpush1.xpose.msra.mxu0 0.0
        %451 = vmatprep.subr.mxu0 0.0
        %452 = vmatpush1.xpose.msra.mxu0 0.0
        %453 = vmatprep.subr.mxu0 0.0
        %454 = vmatpush1.xpose.msra.mxu0 0.0
        %455 = vmatprep.subr.mxu0 0.0
        %456 = vmatpush1.xpose.msra.mxu0 0.0
        %457 = vmatprep.subr.mxu0 0.0
        %458 = vmatpush1.xpose.msra.mxu0 0.0
        %459 = vmatprep.subr.mxu0 0.0
        %460 = vmatpush1.xpose.msra.mxu0 0.0
        %461 = vmatprep.subr.mxu0 0.0
        %462 = vmatpush1.xpose.msra.mxu0 0.0
        %463 = vmatprep.subr.mxu0 0.0
        %464 = vmatpush1.xpose.msra.mxu0 0.0
        %465 = vmatprep.subr.mxu0 0.0
        %466 = vmatpush1.xpose.msra.mxu0 %v435
        %467 = vmatprep.subr.mxu0 0.0
        %468 = vmatpush1.xpose.msra.mxu0 %v433
        %469 = vmatprep.subr.mxu0 0.0
        %470 = vmatpush2.xpose.msra.mxu0 0.0
        %471 = vmatprep.subr.mxu0 0.0
        %472 = vmatpush2.xpose.msra.mxu0 0.0
        %473 = vmatprep.subr.mxu0 0.0
        %474 = vmatpush2.xpose.msra.mxu0 0.0
        %475 = vmatprep.subr.mxu0 0.0
        %476 = vmatpush2.xpose.msra.mxu0 0.0
        %477 = vmatprep.subr.mxu0 0.0
        %478 = vmatpush2.xpose.msra.mxu0 0.0
        %479 = vmatprep.subr.mxu0 0.0
        %480 = vmatpush2.xpose.msra.mxu0 0.0
        %481 = vmatprep.subr.mxu0 0.0
        %482 = vmatpush2.xpose.msra.mxu0 0.0
        %483 = vmatprep.subr.mxu0 0.0
        %484 = vmatpush2.xpose.msra.mxu0 0.0
        %485 = vmatprep.subr.mxu0 0.0
        %486 = vmatpush2.xpose.msra.mxu0 0.0
        %487 = vmatprep.subr.mxu0 0.0
        %488 = vmatpush2.xpose.msra.mxu0 0.0
        %489 = vmatprep.subr.mxu0 0.0
        %490 = vmatpush2.xpose.msra.mxu0 0.0
        %491 = vmatprep.subr.mxu0 0.0
        %492 = vmatpush2.xpose.msra.mxu0 0.0
        %493 = vmatprep.subr.mxu0 0.0
        %494 = vmatpush2.xpose.msra.mxu0 0.0
        %495 = vmatprep.subr.mxu0 0.0
        %496 = vmatpush2.xpose.msra.mxu0 0.0
        %497 = vmatprep.subr.mxu0 0.0
        %498 = vmatpush2.xpose.msra.mxu0 0.0
        %499 = vmatprep.subr.mxu0 0.0
        %500 = vmatpush2.xpose.msra.mxu0 0.0
        %501 = vmatprep.mubr.f32.mxu0 0.0
        %502 = vmatmul.mubr.f32.gmra.mxu0 %v429
        %v503 = vpop.f32.mrf.mxu0
        %v504 = vadd.f32 %v333, %v503
        %v505 = vpop.f32.mrf.mxu0
        %506 = vmatprep.mubr.f32.mxu0 0.0
        %507 = vmatmul.mubr.f32.gmra.mxu0 %v431
        %v508 = vpop.f32.mrf.mxu0
        %v509 = vadd.f32 %v334, %v508
        %v510 = vpop.f32.mrf.mxu0
        %511 = vdwg.mxu0
        %v512 = vsel %vm315, %v504, -inf
        %513 = vmax.xlane.f32.xlu0 %v512
        %v514 = vpop.xlane.xlu0 %513
        %v515 = vsel %vm315, %v509, -inf
        %516 = vmax.xlane.f32.xlu0 %v515
        %v517 = vpop.xlane.xlu0 %516
        %v518 = vsub.f32 %v504, %v514
        %v519 = vsub.f32 %v509, %v517
        %v520 = vmul.f32 %v518, 1.442695
        %v521 = vpow.pop %v520
        %v522 = vmul.f32 %v519, 1.442695
        %v523 = vpow.pop %v522
        %v524 = vsel %vm315, %v521, 0.0
        %525 = vadd.xlane.f32.xlu0 %v524
        %v526 = vpop.xlane.xlu0 %525
        %v527 = vsel %vm315, %v523, 0.0
        %528 = vadd.xlane.f32.xlu0 %v527
        %v529 = vpop.xlane.xlu0 %528
        %v530 = vrcp.pop %v526
        %v531 = vrcp.pop %v529
        %532 = vrot.lane.b32.xlu0 %v415, 64
        %v533 = vpop.permute.xlu0 %532
        %534 = vrot.lane.b32.xlu0 %v420, 64
        %v535 = vpop.permute.xlu0 %534
        %v539 = vsel %vm315, %v521, 0
        %v542 = vsel %vm315, %v523, 0
        %544 = vmatprep.subr.mxu0 0.0
        %545 = vmatpush1.msra.mxu0 0.0
        %546 = vmatprep.subr.mxu0 0.0
        %547 = vmatpush1.msra.mxu0 0.0
        %548 = vmatprep.subr.mxu0 0.0
        %549 = vmatpush1.msra.mxu0 0.0
        %550 = vmatprep.subr.mxu0 0.0
        %551 = vmatpush1.msra.mxu0 0.0
        %552 = vmatprep.subr.mxu0 0.0
        %553 = vmatpush1.msra.mxu0 0.0
        %554 = vmatprep.subr.mxu0 0.0
        %555 = vmatpush1.msra.mxu0 0.0
        %556 = vmatprep.subr.mxu0 0.0
        %557 = vmatpush1.msra.mxu0 0.0
        %558 = vmatprep.subr.mxu0 0.0
        %559 = vmatpush1.msra.mxu0 0.0
        %560 = vmatprep.subr.mxu0 0.0
        %561 = vmatpush1.msra.mxu0 0.0
        %562 = vmatprep.subr.mxu0 0.0
        %563 = vmatpush1.msra.mxu0 0.0
        %564 = vmatprep.subr.mxu0 0.0
        %565 = vmatpush1.msra.mxu0 0.0
        %566 = vmatprep.subr.mxu0 0.0
        %567 = vmatpush1.msra.mxu0 0.0
        %568 = vmatprep.subr.mxu0 0.0
        %569 = vmatpush1.msra.mxu0 0.0
        %570 = vmatprep.subr.mxu0 0.0
        %571 = vmatpush1.msra.mxu0 0.0
        %572 = vmatprep.subr.mxu0 0.0
        %573 = vmatpush1.msra.mxu0 %v535
        %574 = vmatprep.subr.mxu0 0.0
        %575 = vmatpush1.msra.mxu0 %v533
        %576 = vmatprep.subr.mxu0 0.0
        %577 = vmatpush2.msra.mxu0 0.0
        %578 = vmatprep.subr.mxu0 0.0
        %579 = vmatpush2.msra.mxu0 0.0
        %580 = vmatprep.subr.mxu0 0.0
        %581 = vmatpush2.msra.mxu0 0.0
        %582 = vmatprep.subr.mxu0 0.0
        %583 = vmatpush2.msra.mxu0 0.0
        %584 = vmatprep.subr.mxu0 0.0
        %585 = vmatpush2.msra.mxu0 0.0
        %586 = vmatprep.subr.mxu0 0.0
        %587 = vmatpush2.msra.mxu0 0.0
        %588 = vmatprep.subr.mxu0 0.0
        %589 = vmatpush2.msra.mxu0 0.0
        %590 = vmatprep.subr.mxu0 0.0
        %591 = vmatpush2.msra.mxu0 0.0
        %592 = vmatprep.subr.mxu0 0.0
        %593 = vmatpush2.msra.mxu0 0.0
        %594 = vmatprep.subr.mxu0 0.0
        %595 = vmatpush2.msra.mxu0 0.0
        %596 = vmatprep.subr.mxu0 0.0
        %597 = vmatpush2.msra.mxu0 0.0
        %598 = vmatprep.subr.mxu0 0.0
        %599 = vmatpush2.msra.mxu0 0.0
        %600 = vmatprep.subr.mxu0 0.0
        %601 = vmatpush2.msra.mxu0 0.0
        %602 = vmatprep.subr.mxu0 0.0
        %603 = vmatpush2.msra.mxu0 0.0
        %604 = vmatprep.subr.mxu0 0.0
        %605 = vmatpush2.msra.mxu0 0.0
        %606 = vmatprep.subr.mxu0 0.0
        %607 = vmatpush2.msra.mxu0 0.0
        %608 = vmatprep.mubr.f32.mxu0 0.0
        %609 = vmatmul.mubr.f32.gmra.mxu0 %v539
        %v610 = vpop.f32.mrf.mxu0
        %v611 = vadd.f32 0.0, %v610
        %v612 = vpop.f32.mrf.mxu0
        %613 = vmatprep.mubr.f32.mxu0 0.0
        %614 = vmatmul.mubr.f32.gmra.mxu0 %v542
        %v615 = vpop.f32.mrf.mxu0
        %v616 = vadd.f32 0.0, %v615
        %v617 = vpop.f32.mrf.mxu0
        %618 = vdwg.mxu0
        %v619 = vmul.f32 %v611, %v530
        %v620 = vmul.f32 %v616, %v531
        %621 = vrot.lane.b32.xlu0 %v415, 120
        %v622 = vpop.permute.xlu0 %621
        %623 = vrot.lane.b32.xlu0 %v420, 120
        %v624 = vpop.permute.xlu0 %623
        %625 = vrot.lane.b32.xlu0 %v415, 88
        %v626 = vpop.permute.xlu0 %625
        %627 = vrot.lane.b32.xlu0 %v420, 88
        %v628 = vpop.permute.xlu0 %627
        %v629 = vsel %vm321, %v622, 0
        %v631 = vsel %vm321, %v624, 0
        %v633 = vsel %vm321, %v626, 0
        %v635 = vsel %vm321, %v628, 0
        %637 = vmatprep.subr.mxu0 0.0
        %638 = vmatpush1.xpose.msra.mxu0 0.0
        %639 = vmatprep.subr.mxu0 0.0
        %640 = vmatpush1.xpose.msra.mxu0 0.0
        %641 = vmatprep.subr.mxu0 0.0
        %642 = vmatpush1.xpose.msra.mxu0 0.0
        %643 = vmatprep.subr.mxu0 0.0
        %644 = vmatpush1.xpose.msra.mxu0 0.0
        %645 = vmatprep.subr.mxu0 0.0
        %646 = vmatpush1.xpose.msra.mxu0 0.0
        %647 = vmatprep.subr.mxu0 0.0
        %648 = vmatpush1.xpose.msra.mxu0 0.0
        %649 = vmatprep.subr.mxu0 0.0
        %650 = vmatpush1.xpose.msra.mxu0 0.0
        %651 = vmatprep.subr.mxu0 0.0
        %652 = vmatpush1.xpose.msra.mxu0 0.0
        %653 = vmatprep.subr.mxu0 0.0
        %654 = vmatpush1.xpose.msra.mxu0 0.0
        %655 = vmatprep.subr.mxu0 0.0
        %656 = vmatpush1.xpose.msra.mxu0 0.0
        %657 = vmatprep.subr.mxu0 0.0
        %658 = vmatpush1.xpose.msra.mxu0 0.0
        %659 = vmatprep.subr.mxu0 0.0
        %660 = vmatpush1.xpose.msra.mxu0 0.0
        %661 = vmatprep.subr.mxu0 0.0
        %662 = vmatpush1.xpose.msra.mxu0 0.0
        %663 = vmatprep.subr.mxu0 0.0
        %664 = vmatpush1.xpose.msra.mxu0 0.0
        %665 = vmatprep.subr.mxu0 0.0
        %666 = vmatpush1.xpose.msra.mxu0 %v635
        %667 = vmatprep.subr.mxu0 0.0
        %668 = vmatpush1.xpose.msra.mxu0 %v633
        %669 = vmatprep.subr.mxu0 0.0
        %670 = vmatpush2.xpose.msra.mxu0 0.0
        %671 = vmatprep.subr.mxu0 0.0
        %672 = vmatpush2.xpose.msra.mxu0 0.0
        %673 = vmatprep.subr.mxu0 0.0
        %674 = vmatpush2.xpose.msra.mxu0 0.0
        %675 = vmatprep.subr.mxu0 0.0
        %676 = vmatpush2.xpose.msra.mxu0 0.0
        %677 = vmatprep.subr.mxu0 0.0
        %678 = vmatpush2.xpose.msra.mxu0 0.0
        %679 = vmatprep.subr.mxu0 0.0
        %680 = vmatpush2.xpose.msra.mxu0 0.0
        %681 = vmatprep.subr.mxu0 0.0
        %682 = vmatpush2.xpose.msra.mxu0 0.0
        %683 = vmatprep.subr.mxu0 0.0
        %684 = vmatpush2.xpose.msra.mxu0 0.0
        %685 = vmatprep.subr.mxu0 0.0
        %686 = vmatpush2.xpose.msra.mxu0 0.0
        %687 = vmatprep.subr.mxu0 0.0
        %688 = vmatpush2.xpose.msra.mxu0 0.0
        %689 = vmatprep.subr.mxu0 0.0
        %690 = vmatpush2.xpose.msra.mxu0 0.0
        %691 = vmatprep.subr.mxu0 0.0
        %692 = vmatpush2.xpose.msra.mxu0 0.0
        %693 = vmatprep.subr.mxu0 0.0
        %694 = vmatpush2.xpose.msra.mxu0 0.0
        %695 = vmatprep.subr.mxu0 0.0
        %696 = vmatpush2.xpose.msra.mxu0 0.0
        %697 = vmatprep.subr.mxu0 0.0
        %698 = vmatpush2.xpose.msra.mxu0 0.0
        %699 = vmatprep.subr.mxu0 0.0
        %700 = vmatpush2.xpose.msra.mxu0 0.0
        %701 = vmatprep.mubr.f32.mxu0 0.0
        %702 = vmatmul.mubr.f32.gmra.mxu0 %v629
        %v703 = vpop.f32.mrf.mxu0
        %v704 = vadd.f32 %v333, %v703
        %v705 = vpop.f32.mrf.mxu0
        %706 = vmatprep.mubr.f32.mxu0 0.0
        %707 = vmatmul.mubr.f32.gmra.mxu0 %v631
        %v708 = vpop.f32.mrf.mxu0
        %v709 = vadd.f32 %v334, %v708
        %v710 = vpop.f32.mrf.mxu0
        %711 = vdwg.mxu0
        %v712 = vsel %vm315, %v704, -inf
        %713 = vmax.xlane.f32.xlu0 %v712
        %v714 = vpop.xlane.xlu0 %713
        %v715 = vsel %vm315, %v709, -inf
        %716 = vmax.xlane.f32.xlu0 %v715
        %v717 = vpop.xlane.xlu0 %716
        %v718 = vsub.f32 %v704, %v714
        %v719 = vsub.f32 %v709, %v717
        %v720 = vmul.f32 %v718, 1.442695
        %v721 = vpow.pop %v720
        %v722 = vmul.f32 %v719, 1.442695
        %v723 = vpow.pop %v722
        %v724 = vsel %vm315, %v721, 0.0
        %725 = vadd.xlane.f32.xlu0 %v724
        %v726 = vpop.xlane.xlu0 %725
        %v727 = vsel %vm315, %v723, 0.0
        %728 = vadd.xlane.f32.xlu0 %v727
        %v729 = vpop.xlane.xlu0 %728
        %v730 = vrcp.pop %v726
        %v731 = vrcp.pop %v729
        %732 = vrot.lane.b32.xlu0 %v415, 56
        %v733 = vpop.permute.xlu0 %732
        %734 = vrot.lane.b32.xlu0 %v420, 56
        %v735 = vpop.permute.xlu0 %734
        %v739 = vsel %vm315, %v721, 0
        %v742 = vsel %vm315, %v723, 0
        %744 = vmatprep.subr.mxu0 0.0
        %745 = vmatpush1.msra.mxu0 0.0
        %746 = vmatprep.subr.mxu0 0.0
        %747 = vmatpush1.msra.mxu0 0.0
        %748 = vmatprep.subr.mxu0 0.0
        %749 = vmatpush1.msra.mxu0 0.0
        %750 = vmatprep.subr.mxu0 0.0
        %751 = vmatpush1.msra.mxu0 0.0
        %752 = vmatprep.subr.mxu0 0.0
        %753 = vmatpush1.msra.mxu0 0.0
        %754 = vmatprep.subr.mxu0 0.0
        %755 = vmatpush1.msra.mxu0 0.0
        %756 = vmatprep.subr.mxu0 0.0
        %757 = vmatpush1.msra.mxu0 0.0
        %758 = vmatprep.subr.mxu0 0.0
        %759 = vmatpush1.msra.mxu0 0.0
        %760 = vmatprep.subr.mxu0 0.0
        %761 = vmatpush1.msra.mxu0 0.0
        %762 = vmatprep.subr.mxu0 0.0
        %763 = vmatpush1.msra.mxu0 0.0
        %764 = vmatprep.subr.mxu0 0.0
        %765 = vmatpush1.msra.mxu0 0.0
        %766 = vmatprep.subr.mxu0 0.0
        %767 = vmatpush1.msra.mxu0 0.0
        %768 = vmatprep.subr.mxu0 0.0
        %769 = vmatpush1.msra.mxu0 0.0
        %770 = vmatprep.subr.mxu0 0.0
        %771 = vmatpush1.msra.mxu0 0.0
        %772 = vmatprep.subr.mxu0 0.0
        %773 = vmatpush1.msra.mxu0 %v735
        %774 = vmatprep.subr.mxu0 0.0
        %775 = vmatpush1.msra.mxu0 %v733
        %776 = vmatprep.subr.mxu0 0.0
        %777 = vmatpush2.msra.mxu0 0.0
        %778 = vmatprep.subr.mxu0 0.0
        %779 = vmatpush2.msra.mxu0 0.0
        %780 = vmatprep.subr.mxu0 0.0
        %781 = vmatpush2.msra.mxu0 0.0
        %782 = vmatprep.subr.mxu0 0.0
        %783 = vmatpush2.msra.mxu0 0.0
        %784 = vmatprep.subr.mxu0 0.0
        %785 = vmatpush2.msra.mxu0 0.0
        %786 = vmatprep.subr.mxu0 0.0
        %787 = vmatpush2.msra.mxu0 0.0
        %788 = vmatprep.subr.mxu0 0.0
        %789 = vmatpush2.msra.mxu0 0.0
        %790 = vmatprep.subr.mxu0 0.0
        %791 = vmatpush2.msra.mxu0 0.0
        %792 = vmatprep.subr.mxu0 0.0
        %793 = vmatpush2.msra.mxu0 0.0
        %794 = vmatprep.subr.mxu0 0.0
        %795 = vmatpush2.msra.mxu0 0.0
        %796 = vmatprep.subr.mxu0 0.0
        %797 = vmatpush2.msra.mxu0 0.0
        %798 = vmatprep.subr.mxu0 0.0
        %799 = vmatpush2.msra.mxu0 0.0
        %800 = vmatprep.subr.mxu0 0.0
        %801 = vmatpush2.msra.mxu0 0.0
        %802 = vmatprep.subr.mxu0 0.0
        %803 = vmatpush2.msra.mxu0 0.0
        %804 = vmatprep.subr.mxu0 0.0
        %805 = vmatpush2.msra.mxu0 0.0
        %806 = vmatprep.subr.mxu0 0.0
        %807 = vmatpush2.msra.mxu0 0.0
        %808 = vmatprep.mubr.f32.mxu0 0.0
        %809 = vmatmul.mubr.f32.gmra.mxu0 %v739
        %v810 = vpop.f32.mrf.mxu0
        %v811 = vadd.f32 0.0, %v810
        %v812 = vpop.f32.mrf.mxu0
        %813 = vmatprep.mubr.f32.mxu0 0.0
        %814 = vmatmul.mubr.f32.gmra.mxu0 %v742
        %v815 = vpop.f32.mrf.mxu0
        %v816 = vadd.f32 0.0, %v815
        %v817 = vpop.f32.mrf.mxu0
        %818 = vdwg.mxu0
        %v819 = vmul.f32 %v811, %v730
        %v820 = vmul.f32 %v816, %v731
        %821 = vrot.lane.b32.xlu0 %v415, 112
        %v822 = vpop.permute.xlu0 %821
        %823 = vrot.lane.b32.xlu0 %v420, 112
        %v824 = vpop.permute.xlu0 %823
        %825 = vrot.lane.b32.xlu0 %v415, 80
        %v826 = vpop.permute.xlu0 %825
        %827 = vrot.lane.b32.xlu0 %v420, 80
        %v828 = vpop.permute.xlu0 %827
        %v829 = vsel %vm321, %v822, 0
        %v831 = vsel %vm321, %v824, 0
        %v833 = vsel %vm321, %v826, 0
        %v835 = vsel %vm321, %v828, 0
        %837 = vmatprep.subr.mxu0 0.0
        %838 = vmatpush1.xpose.msra.mxu0 0.0
        %839 = vmatprep.subr.mxu0 0.0
        %840 = vmatpush1.xpose.msra.mxu0 0.0
        %841 = vmatprep.subr.mxu0 0.0
        %842 = vmatpush1.xpose.msra.mxu0 0.0
        %843 = vmatprep.subr.mxu0 0.0
        %844 = vmatpush1.xpose.msra.mxu0 0.0
        %845 = vmatprep.subr.mxu0 0.0
        %846 = vmatpush1.xpose.msra.mxu0 0.0
        %847 = vmatprep.subr.mxu0 0.0
        %848 = vmatpush1.xpose.msra.mxu0 0.0
        %849 = vmatprep.subr.mxu0 0.0
        %850 = vmatpush1.xpose.msra.mxu0 0.0
        %851 = vmatprep.subr.mxu0 0.0
        %852 = vmatpush1.xpose.msra.mxu0 0.0
        %853 = vmatprep.subr.mxu0 0.0
        %854 = vmatpush1.xpose.msra.mxu0 0.0
        %855 = vmatprep.subr.mxu0 0.0
        %856 = vmatpush1.xpose.msra.mxu0 0.0
        %857 = vmatprep.subr.mxu0 0.0
        %858 = vmatpush1.xpose.msra.mxu0 0.0
        %859 = vmatprep.subr.mxu0 0.0
        %860 = vmatpush1.xpose.msra.mxu0 0.0
        %861 = vmatprep.subr.mxu0 0.0
        %862 = vmatpush1.xpose.msra.mxu0 0.0
        %863 = vmatprep.subr.mxu0 0.0
        %864 = vmatpush1.xpose.msra.mxu0 0.0
        %865 = vmatprep.subr.mxu0 0.0
        %866 = vmatpush1.xpose.msra.mxu0 %v835
        %867 = vmatprep.subr.mxu0 0.0
        %868 = vmatpush1.xpose.msra.mxu0 %v833
        %869 = vmatprep.subr.mxu0 0.0
        %870 = vmatpush2.xpose.msra.mxu0 0.0
        %871 = vmatprep.subr.mxu0 0.0
        %872 = vmatpush2.xpose.msra.mxu0 0.0
        %873 = vmatprep.subr.mxu0 0.0
        %874 = vmatpush2.xpose.msra.mxu0 0.0
        %875 = vmatprep.subr.mxu0 0.0
        %876 = vmatpush2.xpose.msra.mxu0 0.0
        %877 = vmatprep.subr.mxu0 0.0
        %878 = vmatpush2.xpose.msra.mxu0 0.0
        %879 = vmatprep.subr.mxu0 0.0
        %880 = vmatpush2.xpose.msra.mxu0 0.0
        %881 = vmatprep.subr.mxu0 0.0
        %882 = vmatpush2.xpose.msra.mxu0 0.0
        %883 = vmatprep.subr.mxu0 0.0
        %884 = vmatpush2.xpose.msra.mxu0 0.0
        %885 = vmatprep.subr.mxu0 0.0
        %886 = vmatpush2.xpose.msra.mxu0 0.0
        %887 = vmatprep.subr.mxu0 0.0
        %888 = vmatpush2.xpose.msra.mxu0 0.0
        %889 = vmatprep.subr.mxu0 0.0
        %890 = vmatpush2.xpose.msra.mxu0 0.0
        %891 = vmatprep.subr.mxu0 0.0
        %892 = vmatpush2.xpose.msra.mxu0 0.0
        %893 = vmatprep.subr.mxu0 0.0
        %894 = vmatpush2.xpose.msra.mxu0 0.0
        %895 = vmatprep.subr.mxu0 0.0
        %896 = vmatpush2.xpose.msra.mxu0 0.0
        %897 = vmatprep.subr.mxu0 0.0
        %898 = vmatpush2.xpose.msra.mxu0 0.0
        %899 = vmatprep.subr.mxu0 0.0
        %900 = vmatpush2.xpose.msra.mxu0 0.0
        %901 = vmatprep.mubr.f32.mxu0 0.0
        %902 = vmatmul.mubr.f32.gmra.mxu0 %v829
        %v903 = vpop.f32.mrf.mxu0
        %v904 = vadd.f32 %v333, %v903
        %v905 = vpop.f32.mrf.mxu0
        %906 = vmatprep.mubr.f32.mxu0 0.0
        %907 = vmatmul.mubr.f32.gmra.mxu0 %v831
        %v908 = vpop.f32.mrf.mxu0
        %v909 = vadd.f32 %v334, %v908
        %v910 = vpop.f32.mrf.mxu0
        %911 = vdwg.mxu0
        %v912 = vsel %vm315, %v904, -inf
        %913 = vmax.xlane.f32.xlu0 %v912
        %v914 = vpop.xlane.xlu0 %913
        %v915 = vsel %vm315, %v909, -inf
        %916 = vmax.xlane.f32.xlu0 %v915
        %v917 = vpop.xlane.xlu0 %916
        %v918 = vsub.f32 %v904, %v914
        %v919 = vsub.f32 %v909, %v917
        %v920 = vmul.f32 %v918, 1.442695
        %v921 = vpow.pop %v920
        %v922 = vmul.f32 %v919, 1.442695
        %v923 = vpow.pop %v922
        %v924 = vsel %vm315, %v921, 0.0
        %925 = vadd.xlane.f32.xlu0 %v924
        %v926 = vpop.xlane.xlu0 %925
        %v927 = vsel %vm315, %v923, 0.0
        %928 = vadd.xlane.f32.xlu0 %v927
        %v929 = vpop.xlane.xlu0 %928
        %v930 = vrcp.pop %v926
        %v931 = vrcp.pop %v929
        %932 = vrot.lane.b32.xlu0 %v415, 48
        %v933 = vpop.permute.xlu0 %932
        %934 = vrot.lane.b32.xlu0 %v420, 48
        %v935 = vpop.permute.xlu0 %934
        %v939 = vsel %vm315, %v921, 0
        %v942 = vsel %vm315, %v923, 0
        %944 = vmatprep.subr.mxu0 0.0
        %945 = vmatpush1.msra.mxu0 0.0
        %946 = vmatprep.subr.mxu0 0.0
        %947 = vmatpush1.msra.mxu0 0.0
        %948 = vmatprep.subr.mxu0 0.0
        %949 = vmatpush1.msra.mxu0 0.0
        %950 = vmatprep.subr.mxu0 0.0
        %951 = vmatpush1.msra.mxu0 0.0
        %952 = vmatprep.subr.mxu0 0.0
        %953 = vmatpush1.msra.mxu0 0.0
        %954 = vmatprep.subr.mxu0 0.0
        %955 = vmatpush1.msra.mxu0 0.0
        %956 = vmatprep.subr.mxu0 0.0
        %957 = vmatpush1.msra.mxu0 0.0
        %958 = vmatprep.subr.mxu0 0.0
        %959 = vmatpush1.msra.mxu0 0.0
        %960 = vmatprep.subr.mxu0 0.0
        %961 = vmatpush1.msra.mxu0 0.0
        %962 = vmatprep.subr.mxu0 0.0
        %963 = vmatpush1.msra.mxu0 0.0
        %964 = vmatprep.subr.mxu0 0.0
        %965 = vmatpush1.msra.mxu0 0.0
        %966 = vmatprep.subr.mxu0 0.0
        %967 = vmatpush1.msra.mxu0 0.0
        %968 = vmatprep.subr.mxu0 0.0
        %969 = vmatpush1.msra.mxu0 0.0
        %970 = vmatprep.subr.mxu0 0.0
        %971 = vmatpush1.msra.mxu0 0.0
        %972 = vmatprep.subr.mxu0 0.0
        %973 = vmatpush1.msra.mxu0 %v935
        %974 = vmatprep.subr.mxu0 0.0
        %975 = vmatpush1.msra.mxu0 %v933
        %976 = vmatprep.subr.mxu0 0.0
        %977 = vmatpush2.msra.mxu0 0.0
        %978 = vmatprep.subr.mxu0 0.0
        %979 = vmatpush2.msra.mxu0 0.0
        %980 = vmatprep.subr.mxu0 0.0
        %981 = vmatpush2.msra.mxu0 0.0
        %982 = vmatprep.subr.mxu0 0.0
        %983 = vmatpush2.msra.mxu0 0.0
        %984 = vmatprep.subr.mxu0 0.0
        %985 = vmatpush2.msra.mxu0 0.0
        %986 = vmatprep.subr.mxu0 0.0
        %987 = vmatpush2.msra.mxu0 0.0
        %988 = vmatprep.subr.mxu0 0.0
        %989 = vmatpush2.msra.mxu0 0.0
        %990 = vmatprep.subr.mxu0 0.0
        %991 = vmatpush2.msra.mxu0 0.0
        %992 = vmatprep.subr.mxu0 0.0
        %993 = vmatpush2.msra.mxu0 0.0
        %994 = vmatprep.subr.mxu0 0.0
        %995 = vmatpush2.msra.mxu0 0.0
        %996 = vmatprep.subr.mxu0 0.0
        %997 = vmatpush2.msra.mxu0 0.0
        %998 = vmatprep.subr.mxu0 0.0
        %999 = vmatpush2.msra.mxu0 0.0
        %1000 = vmatprep.subr.mxu0 0.0
        %1001 = vmatpush2.msra.mxu0 0.0
        %1002 = vmatprep.subr.mxu0 0.0
        %1003 = vmatpush2.msra.mxu0 0.0
        %1004 = vmatprep.subr.mxu0 0.0
        %1005 = vmatpush2.msra.mxu0 0.0
        %1006 = vmatprep.subr.mxu0 0.0
        %1007 = vmatpush2.msra.mxu0 0.0
        %1008 = vmatprep.mubr.f32.mxu0 0.0
        %1009 = vmatmul.mubr.f32.gmra.mxu0 %v939
        %v1010 = vpop.f32.mrf.mxu0
        %v1011 = vadd.f32 0.0, %v1010
        %v1012 = vpop.f32.mrf.mxu0
        %1013 = vmatprep.mubr.f32.mxu0 0.0
        %1014 = vmatmul.mubr.f32.gmra.mxu0 %v942
        %v1015 = vpop.f32.mrf.mxu0
        %v1016 = vadd.f32 0.0, %v1015
        %v1017 = vpop.f32.mrf.mxu0
        %1018 = vdwg.mxu0
        %v1019 = vmul.f32 %v1011, %v930
        %v1020 = vmul.f32 %v1016, %v931
        %1021 = vrot.lane.b32.xlu0 %v415, 104
        %v1022 = vpop.permute.xlu0 %1021
        %1023 = vrot.lane.b32.xlu0 %v420, 104
        %v1024 = vpop.permute.xlu0 %1023
        %1025 = vrot.lane.b32.xlu0 %v415, 72
        %v1026 = vpop.permute.xlu0 %1025
        %1027 = vrot.lane.b32.xlu0 %v420, 72
        %v1028 = vpop.permute.xlu0 %1027
        %v1029 = vsel %vm321, %v1022, 0
        %v1031 = vsel %vm321, %v1024, 0
        %v1033 = vsel %vm321, %v1026, 0
        %v1035 = vsel %vm321, %v1028, 0
        %1037 = vmatprep.subr.mxu0 0.0
        %1038 = vmatpush1.xpose.msra.mxu0 0.0
        %1039 = vmatprep.subr.mxu0 0.0
        %1040 = vmatpush1.xpose.msra.mxu0 0.0
        %1041 = vmatprep.subr.mxu0 0.0
        %1042 = vmatpush1.xpose.msra.mxu0 0.0
        %1043 = vmatprep.subr.mxu0 0.0
        %1044 = vmatpush1.xpose.msra.mxu0 0.0
        %1045 = vmatprep.subr.mxu0 0.0
        %1046 = vmatpush1.xpose.msra.mxu0 0.0
        %1047 = vmatprep.subr.mxu0 0.0
        %1048 = vmatpush1.xpose.msra.mxu0 0.0
        %1049 = vmatprep.subr.mxu0 0.0
        %1050 = vmatpush1.xpose.msra.mxu0 0.0
        %1051 = vmatprep.subr.mxu0 0.0
        %1052 = vmatpush1.xpose.msra.mxu0 0.0
        %1053 = vmatprep.subr.mxu0 0.0
        %1054 = vmatpush1.xpose.msra.mxu0 0.0
        %1055 = vmatprep.subr.mxu0 0.0
        %1056 = vmatpush1.xpose.msra.mxu0 0.0
        %1057 = vmatprep.subr.mxu0 0.0
        %1058 = vmatpush1.xpose.msra.mxu0 0.0
        %1059 = vmatprep.subr.mxu0 0.0
        %1060 = vmatpush1.xpose.msra.mxu0 0.0
        %1061 = vmatprep.subr.mxu0 0.0
        %1062 = vmatpush1.xpose.msra.mxu0 0.0
        %1063 = vmatprep.subr.mxu0 0.0
        %1064 = vmatpush1.xpose.msra.mxu0 0.0
        %1065 = vmatprep.subr.mxu0 0.0
        %1066 = vmatpush1.xpose.msra.mxu0 %v1035
        %1067 = vmatprep.subr.mxu0 0.0
        %1068 = vmatpush1.xpose.msra.mxu0 %v1033
        %1069 = vmatprep.subr.mxu0 0.0
        %1070 = vmatpush2.xpose.msra.mxu0 0.0
        %1071 = vmatprep.subr.mxu0 0.0
        %1072 = vmatpush2.xpose.msra.mxu0 0.0
        %1073 = vmatprep.subr.mxu0 0.0
        %1074 = vmatpush2.xpose.msra.mxu0 0.0
        %1075 = vmatprep.subr.mxu0 0.0
        %1076 = vmatpush2.xpose.msra.mxu0 0.0
        %1077 = vmatprep.subr.mxu0 0.0
        %1078 = vmatpush2.xpose.msra.mxu0 0.0
        %1079 = vmatprep.subr.mxu0 0.0
        %1080 = vmatpush2.xpose.msra.mxu0 0.0
        %1081 = vmatprep.subr.mxu0 0.0
        %1082 = vmatpush2.xpose.msra.mxu0 0.0
        %1083 = vmatprep.subr.mxu0 0.0
        %1084 = vmatpush2.xpose.msra.mxu0 0.0
        %1085 = vmatprep.subr.mxu0 0.0
        %1086 = vmatpush2.xpose.msra.mxu0 0.0
        %1087 = vmatprep.subr.mxu0 0.0
        %1088 = vmatpush2.xpose.msra.mxu0 0.0
        %1089 = vmatprep.subr.mxu0 0.0
        %1090 = vmatpush2.xpose.msra.mxu0 0.0
        %1091 = vmatprep.subr.mxu0 0.0
        %1092 = vmatpush2.xpose.msra.mxu0 0.0
        %1093 = vmatprep.subr.mxu0 0.0
        %1094 = vmatpush2.xpose.msra.mxu0 0.0
        %1095 = vmatprep.subr.mxu0 0.0
        %1096 = vmatpush2.xpose.msra.mxu0 0.0
        %1097 = vmatprep.subr.mxu0 0.0
        %1098 = vmatpush2.xpose.msra.mxu0 0.0
        %1099 = vmatprep.subr.mxu0 0.0
        %1100 = vmatpush2.xpose.msra.mxu0 0.0
        %1101 = vmatprep.mubr.f32.mxu0 0.0
        %1102 = vmatmul.mubr.f32.gmra.mxu0 %v1029
        %v1103 = vpop.f32.mrf.mxu0
        %v1104 = vadd.f32 %v333, %v1103
        %v1105 = vpop.f32.mrf.mxu0
        %1106 = vmatprep.mubr.f32.mxu0 0.0
        %1107 = vmatmul.mubr.f32.gmra.mxu0 %v1031
        %v1108 = vpop.f32.mrf.mxu0
        %v1109 = vadd.f32 %v334, %v1108
        %v1110 = vpop.f32.mrf.mxu0
        %1111 = vdwg.mxu0
        %v1112 = vsel %vm315, %v1104, -inf
        %1113 = vmax.xlane.f32.xlu0 %v1112
        %v1114 = vpop.xlane.xlu0 %1113
        %v1115 = vsel %vm315, %v1109, -inf
        %1116 = vmax.xlane.f32.xlu0 %v1115
        %v1117 = vpop.xlane.xlu0 %1116
        %v1118 = vsub.f32 %v1104, %v1114
        %v1119 = vsub.f32 %v1109, %v1117
        %v1120 = vmul.f32 %v1118, 1.442695
        %v1121 = vpow.pop %v1120
        %v1122 = vmul.f32 %v1119, 1.442695
        %v1123 = vpow.pop %v1122
        %v1124 = vsel %vm315, %v1121, 0.0
        %1125 = vadd.xlane.f32.xlu0 %v1124
        %v1126 = vpop.xlane.xlu0 %1125
        %v1127 = vsel %vm315, %v1123, 0.0
        %1128 = vadd.xlane.f32.xlu0 %v1127
        %v1129 = vpop.xlane.xlu0 %1128
        %v1130 = vrcp.pop %v1126
        %v1131 = vrcp.pop %v1129
        %1132 = vrot.lane.b32.xlu0 %v415, 40
        %v1133 = vpop.permute.xlu0 %1132
        %1134 = vrot.lane.b32.xlu0 %v420, 40
        %v1135 = vpop.permute.xlu0 %1134
        %v1139 = vsel %vm315, %v1121, 0
        %v1142 = vsel %vm315, %v1123, 0
        %1144 = vmatprep.subr.mxu0 0.0
        %1145 = vmatpush1.msra.mxu0 0.0
        %1146 = vmatprep.subr.mxu0 0.0
        %1147 = vmatpush1.msra.mxu0 0.0
        %1148 = vmatprep.subr.mxu0 0.0
        %1149 = vmatpush1.msra.mxu0 0.0
        %1150 = vmatprep.subr.mxu0 0.0
        %1151 = vmatpush1.msra.mxu0 0.0
        %1152 = vmatprep.subr.mxu0 0.0
        %1153 = vmatpush1.msra.mxu0 0.0
        %1154 = vmatprep.subr.mxu0 0.0
        %1155 = vmatpush1.msra.mxu0 0.0
        %1156 = vmatprep.subr.mxu0 0.0
        %1157 = vmatpush1.msra.mxu0 0.0
        %1158 = vmatprep.subr.mxu0 0.0
        %1159 = vmatpush1.msra.mxu0 0.0
        %1160 = vmatprep.subr.mxu0 0.0
        %1161 = vmatpush1.msra.mxu0 0.0
        %1162 = vmatprep.subr.mxu0 0.0
        %1163 = vmatpush1.msra.mxu0 0.0
        %1164 = vmatprep.subr.mxu0 0.0
        %1165 = vmatpush1.msra.mxu0 0.0
        %1166 = vmatprep.subr.mxu0 0.0
        %1167 = vmatpush1.msra.mxu0 0.0
        %1168 = vmatprep.subr.mxu0 0.0
        %1169 = vmatpush1.msra.mxu0 0.0
        %1170 = vmatprep.subr.mxu0 0.0
        %1171 = vmatpush1.msra.mxu0 0.0
        %1172 = vmatprep.subr.mxu0 0.0
        %1173 = vmatpush1.msra.mxu0 %v1135
        %1174 = vmatprep.subr.mxu0 0.0
        %1175 = vmatpush1.msra.mxu0 %v1133
        %1176 = vmatprep.subr.mxu0 0.0
        %1177 = vmatpush2.msra.mxu0 0.0
        %1178 = vmatprep.subr.mxu0 0.0
        %1179 = vmatpush2.msra.mxu0 0.0
        %1180 = vmatprep.subr.mxu0 0.0
        %1181 = vmatpush2.msra.mxu0 0.0
        %1182 = vmatprep.subr.mxu0 0.0
        %1183 = vmatpush2.msra.mxu0 0.0
        %1184 = vmatprep.subr.mxu0 0.0
        %1185 = vmatpush2.msra.mxu0 0.0
        %1186 = vmatprep.subr.mxu0 0.0
        %1187 = vmatpush2.msra.mxu0 0.0
        %1188 = vmatprep.subr.mxu0 0.0
        %1189 = vmatpush2.msra.mxu0 0.0
        %1190 = vmatprep.subr.mxu0 0.0
        %1191 = vmatpush2.msra.mxu0 0.0
        %1192 = vmatprep.subr.mxu0 0.0
        %1193 = vmatpush2.msra.mxu0 0.0
        %1194 = vmatprep.subr.mxu0 0.0
        %1195 = vmatpush2.msra.mxu0 0.0
        %1196 = vmatprep.subr.mxu0 0.0
        %1197 = vmatpush2.msra.mxu0 0.0
        %1198 = vmatprep.subr.mxu0 0.0
        %1199 = vmatpush2.msra.mxu0 0.0
        %1200 = vmatprep.subr.mxu0 0.0
        %1201 = vmatpush2.msra.mxu0 0.0
        %1202 = vmatprep.subr.mxu0 0.0
        %1203 = vmatpush2.msra.mxu0 0.0
        %1204 = vmatprep.subr.mxu0 0.0
        %1205 = vmatpush2.msra.mxu0 0.0
        %1206 = vmatprep.subr.mxu0 0.0
        %1207 = vmatpush2.msra.mxu0 0.0
        %1208 = vmatprep.mubr.f32.mxu0 0.0
        %1209 = vmatmul.mubr.f32.gmra.mxu0 %v1139
        %v1210 = vpop.f32.mrf.mxu0
        %v1211 = vadd.f32 0.0, %v1210
        %v1212 = vpop.f32.mrf.mxu0
        %1213 = vmatprep.mubr.f32.mxu0 0.0
        %1214 = vmatmul.mubr.f32.gmra.mxu0 %v1142
        %v1215 = vpop.f32.mrf.mxu0
        %v1216 = vadd.f32 0.0, %v1215
        %v1217 = vpop.f32.mrf.mxu0
        %1218 = vdwg.mxu0
        %v1219 = vmul.f32 %v1211, %v1130
        %v1220 = vmul.f32 %v1216, %v1131
        %v1221 = vlaneseq
        %v1222 = vshrl.u32 %v1221, 7
        %v1223 = vadd.s32 %v1222, 8
        %v1224 = vlaneseq
        %v1225 = vand.u32 %v1224, 127
        %v1226 = vmul.u32 %v1222, 4
        %v1227 = vmul.u32 %v1223, 4
        %vm1228 = vcmp.eq.s32.totalorder %v1225, %v1226
        %vm1229 = vcmp.eq.s32.totalorder %v1225, %v1227
        %v1230 = vsel %vm1228, 1, 0
        %v1231 = vsel %vm1229, 1, 0
        %v1232 = vcvt.s32.f32 %v1230
        %v1233 = vcvt.s32.f32 %v1231
        %vm1234 = vcmask 523264
        %v1236 = vsel %vm1234, %v1232, 0
        %v1239 = vsel %vm1234, %v1233, 0
        %1241 = vmatprep.subr.mxu0 0.0
        %1242 = vmatpush1.msra.mxu0 0.0
        %1243 = vmatprep.subr.mxu0 0.0
        %1244 = vmatpush1.msra.mxu0 0.0
        %1245 = vmatprep.subr.mxu0 0.0
        %1246 = vmatpush1.msra.mxu0 0.0
        %1247 = vmatprep.subr.mxu0 0.0
        %1248 = vmatpush1.msra.mxu0 0.0
        %1249 = vmatprep.subr.mxu0 0.0
        %1250 = vmatpush1.msra.mxu0 0.0
        %1251 = vmatprep.subr.mxu0 0.0
        %1252 = vmatpush1.msra.mxu0 0.0
        %1253 = vmatprep.subr.mxu0 0.0
        %1254 = vmatpush1.msra.mxu0 0.0
        %1255 = vmatprep.subr.mxu0 0.0
        %1256 = vmatpush1.msra.mxu0 0.0
        %1257 = vmatprep.subr.mxu0 0.0
        %1258 = vmatpush1.msra.mxu0 %v1220
        %1259 = vmatprep.subr.mxu0 0.0
        %1260 = vmatpush1.msra.mxu0 %v1020
        %1261 = vmatprep.subr.mxu0 0.0
        %1262 = vmatpush1.msra.mxu0 %v820
        %1263 = vmatprep.subr.mxu0 0.0
        %1264 = vmatpush1.msra.mxu0 %v620
        %1265 = vmatprep.subr.mxu0 0.0
        %1266 = vmatpush1.msra.mxu0 %v1219
        %1267 = vmatprep.subr.mxu0 0.0
        %1268 = vmatpush1.msra.mxu0 %v1019
        %1269 = vmatprep.subr.mxu0 0.0
        %1270 = vmatpush1.msra.mxu0 %v819
        %1271 = vmatprep.subr.mxu0 0.0
        %1272 = vmatpush1.msra.mxu0 %v619
        %1273 = vmatprep.subr.mxu0 0.0
        %1274 = vmatpush2.msra.mxu0 0.0
        %1275 = vmatprep.subr.mxu0 0.0
        %1276 = vmatpush2.msra.mxu0 0.0
        %1277 = vmatprep.subr.mxu0 0.0
        %1278 = vmatpush2.msra.mxu0 0.0
        %1279 = vmatprep.subr.mxu0 0.0
        %1280 = vmatpush2.msra.mxu0 0.0
        %1281 = vmatprep.subr.mxu0 0.0
        %1282 = vmatpush2.msra.mxu0 0.0
        %1283 = vmatprep.subr.mxu0 0.0
        %1284 = vmatpush2.msra.mxu0 0.0
        %1285 = vmatprep.subr.mxu0 0.0
        %1286 = vmatpush2.msra.mxu0 0.0
        %1287 = vmatprep.subr.mxu0 0.0
        %1288 = vmatpush2.msra.mxu0 0.0
        %1289 = vmatprep.subr.mxu0 0.0
        %1290 = vmatpush2.msra.mxu0 0.0
        %1291 = vmatprep.subr.mxu0 0.0
        %1292 = vmatpush2.msra.mxu0 0.0
        %1293 = vmatprep.subr.mxu0 0.0
        %1294 = vmatpush2.msra.mxu0 0.0
        %1295 = vmatprep.subr.mxu0 0.0
        %1296 = vmatpush2.msra.mxu0 0.0
        %1297 = vmatprep.subr.mxu0 0.0
        %1298 = vmatpush2.msra.mxu0 0.0
        %1299 = vmatprep.subr.mxu0 0.0
        %1300 = vmatpush2.msra.mxu0 0.0
        %1301 = vmatprep.subr.mxu0 0.0
        %1302 = vmatpush2.msra.mxu0 0.0
        %1303 = vmatprep.subr.mxu0 0.0
        %1304 = vmatpush2.msra.mxu0 0.0
        %1305 = vmatprep.mubr.f32.mxu0 0.0
        %1306 = vmatmul.mubr.f32.gmra.mxu0 %v1236
        %v1307 = vpop.f32.mrf.mxu0
        %v1308 = vadd.f32 0.0, %v1307
        %v1309 = vpop.f32.mrf.mxu0
        %1310 = vmatprep.mubr.f32.mxu0 0.0
        %1311 = vmatmul.mubr.f32.gmra.mxu0 %v1239
        %v1312 = vpop.f32.mrf.mxu0
        %v1313 = vadd.f32 0.0, %v1312
        %v1314 = vpop.f32.mrf.mxu0
        %1315 = vdwg.mxu0
        %v1316 = vadd.s32 %v1226, 1
        %v1317 = vadd.s32 %v1227, 1
        %vm1318 = vcmp.eq.s32.totalorder %v1225, %v1316
        %vm1319 = vcmp.eq.s32.totalorder %v1225, %v1317
        %v1320 = vsel %vm1318, 1, 0
        %v1321 = vsel %vm1319, 1, 0
        %v1322 = vcvt.s32.f32 %v1320
        %v1323 = vcvt.s32.f32 %v1321
        %v1325 = vsel %vm1234, %v1322, 0
        %v1328 = vsel %vm1234, %v1323, 0
        %1330 = vmatprep.subr.mxu0 0.0
        %1331 = vmatpush1.msra.mxu0 0.0
        %1332 = vmatprep.subr.mxu0 0.0
        %1333 = vmatpush1.msra.mxu0 0.0
        %1334 = vmatprep.subr.mxu0 0.0
        %1335 = vmatpush1.msra.mxu0 0.0
        %1336 = vmatprep.subr.mxu0 0.0
        %1337 = vmatpush1.msra.mxu0 0.0
        %1338 = vmatprep.subr.mxu0 0.0
        %1339 = vmatpush1.msra.mxu0 0.0
        %1340 = vmatprep.subr.mxu0 0.0
        %1341 = vmatpush1.msra.mxu0 0.0
        %1342 = vmatprep.subr.mxu0 0.0
        %1343 = vmatpush1.msra.mxu0 0.0
        %1344 = vmatprep.subr.mxu0 0.0
        %1345 = vmatpush1.msra.mxu0 0.0
        %1346 = vmatprep.subr.mxu0 0.0
        %1347 = vmatpush1.msra.mxu0 %v1220
        %1348 = vmatprep.subr.mxu0 0.0
        %1349 = vmatpush1.msra.mxu0 %v1020
        %1350 = vmatprep.subr.mxu0 0.0
        %1351 = vmatpush1.msra.mxu0 %v820
        %1352 = vmatprep.subr.mxu0 0.0
        %1353 = vmatpush1.msra.mxu0 %v620
        %1354 = vmatprep.subr.mxu0 0.0
        %1355 = vmatpush1.msra.mxu0 %v1219
        %1356 = vmatprep.subr.mxu0 0.0
        %1357 = vmatpush1.msra.mxu0 %v1019
        %1358 = vmatprep.subr.mxu0 0.0
        %1359 = vmatpush1.msra.mxu0 %v819
        %1360 = vmatprep.subr.mxu0 0.0
        %1361 = vmatpush1.msra.mxu0 %v619
        %1362 = vmatprep.subr.mxu0 0.0
        %1363 = vmatpush2.msra.mxu0 0.0
        %1364 = vmatprep.subr.mxu0 0.0
        %1365 = vmatpush2.msra.mxu0 0.0
        %1366 = vmatprep.subr.mxu0 0.0
        %1367 = vmatpush2.msra.mxu0 0.0
        %1368 = vmatprep.subr.mxu0 0.0
        %1369 = vmatpush2.msra.mxu0 0.0
        %1370 = vmatprep.subr.mxu0 0.0
        %1371 = vmatpush2.msra.mxu0 0.0
        %1372 = vmatprep.subr.mxu0 0.0
        %1373 = vmatpush2.msra.mxu0 0.0
        %1374 = vmatprep.subr.mxu0 0.0
        %1375 = vmatpush2.msra.mxu0 0.0
        %1376 = vmatprep.subr.mxu0 0.0
        %1377 = vmatpush2.msra.mxu0 0.0
        %1378 = vmatprep.subr.mxu0 0.0
        %1379 = vmatpush2.msra.mxu0 0.0
        %1380 = vmatprep.subr.mxu0 0.0
        %1381 = vmatpush2.msra.mxu0 0.0
        %1382 = vmatprep.subr.mxu0 0.0
        %1383 = vmatpush2.msra.mxu0 0.0
        %1384 = vmatprep.subr.mxu0 0.0
        %1385 = vmatpush2.msra.mxu0 0.0
        %1386 = vmatprep.subr.mxu0 0.0
        %1387 = vmatpush2.msra.mxu0 0.0
        %1388 = vmatprep.subr.mxu0 0.0
        %1389 = vmatpush2.msra.mxu0 0.0
        %1390 = vmatprep.subr.mxu0 0.0
        %1391 = vmatpush2.msra.mxu0 0.0
        %1392 = vmatprep.subr.mxu0 0.0
        %1393 = vmatpush2.msra.mxu0 0.0
        %1394 = vmatprep.mubr.f32.mxu0 0.0
        %1395 = vmatmul.mubr.f32.gmra.mxu0 %v1325
        %v1396 = vpop.f32.mrf.mxu0
        %v1397 = vadd.f32 0.0, %v1396
        %v1398 = vpop.f32.mrf.mxu0
        %1399 = vmatprep.mubr.f32.mxu0 0.0
        %1400 = vmatmul.mubr.f32.gmra.mxu0 %v1328
        %v1401 = vpop.f32.mrf.mxu0
        %v1402 = vadd.f32 0.0, %v1401
        %v1403 = vpop.f32.mrf.mxu0
        %1404 = vdwg.mxu0
        %v1405 = vadd.s32 %v1226, 2
        %v1406 = vadd.s32 %v1227, 2
        %vm1407 = vcmp.eq.s32.totalorder %v1225, %v1405
        %vm1408 = vcmp.eq.s32.totalorder %v1225, %v1406
        %v1409 = vsel %vm1407, 1, 0
        %v1410 = vsel %vm1408, 1, 0
        %v1411 = vcvt.s32.f32 %v1409
        %v1412 = vcvt.s32.f32 %v1410
        %v1414 = vsel %vm1234, %v1411, 0
        %v1417 = vsel %vm1234, %v1412, 0
        %1419 = vmatprep.subr.mxu0 0.0
        %1420 = vmatpush1.msra.mxu0 0.0
        %1421 = vmatprep.subr.mxu0 0.0
        %1422 = vmatpush1.msra.mxu0 0.0
        %1423 = vmatprep.subr.mxu0 0.0
        %1424 = vmatpush1.msra.mxu0 0.0
        %1425 = vmatprep.subr.mxu0 0.0
        %1426 = vmatpush1.msra.mxu0 0.0
        %1427 = vmatprep.subr.mxu0 0.0
        %1428 = vmatpush1.msra.mxu0 0.0
        %1429 = vmatprep.subr.mxu0 0.0
        %1430 = vmatpush1.msra.mxu0 0.0
        %1431 = vmatprep.subr.mxu0 0.0
        %1432 = vmatpush1.msra.mxu0 0.0
        %1433 = vmatprep.subr.mxu0 0.0
        %1434 = vmatpush1.msra.mxu0 0.0
        %1435 = vmatprep.subr.mxu0 0.0
        %1436 = vmatpush1.msra.mxu0 %v1220
        %1437 = vmatprep.subr.mxu0 0.0
        %1438 = vmatpush1.msra.mxu0 %v1020
        %1439 = vmatprep.subr.mxu0 0.0
        %1440 = vmatpush1.msra.mxu0 %v820
        %1441 = vmatprep.subr.mxu0 0.0
        %1442 = vmatpush1.msra.mxu0 %v620
        %1443 = vmatprep.subr.mxu0 0.0
        %1444 = vmatpush1.msra.mxu0 %v1219
        %1445 = vmatprep.subr.mxu0 0.0
        %1446 = vmatpush1.msra.mxu0 %v1019
        %1447 = vmatprep.subr.mxu0 0.0
        %1448 = vmatpush1.msra.mxu0 %v819
        %1449 = vmatprep.subr.mxu0 0.0
        %1450 = vmatpush1.msra.mxu0 %v619
        %1451 = vmatprep.subr.mxu0 0.0
        %1452 = vmatpush2.msra.mxu0 0.0
        %1453 = vmatprep.subr.mxu0 0.0
        %1454 = vmatpush2.msra.mxu0 0.0
        %1455 = vmatprep.subr.mxu0 0.0
        %1456 = vmatpush2.msra.mxu0 0.0
        %1457 = vmatprep.subr.mxu0 0.0
        %1458 = vmatpush2.msra.mxu0 0.0
        %1459 = vmatprep.subr.mxu0 0.0
        %1460 = vmatpush2.msra.mxu0 0.0
        %1461 = vmatprep.subr.mxu0 0.0
        %1462 = vmatpush2.msra.mxu0 0.0
        %1463 = vmatprep.subr.mxu0 0.0
        %1464 = vmatpush2.msra.mxu0 0.0
        %1465 = vmatprep.subr.mxu0 0.0
        %1466 = vmatpush2.msra.mxu0 0.0
        %1467 = vmatprep.subr.mxu0 0.0
        %1468 = vmatpush2.msra.mxu0 0.0
        %1469 = vmatprep.subr.mxu0 0.0
        %1470 = vmatpush2.msra.mxu0 0.0
        %1471 = vmatprep.subr.mxu0 0.0
        %1472 = vmatpush2.msra.mxu0 0.0
        %1473 = vmatprep.subr.mxu0 0.0
        %1474 = vmatpush2.msra.mxu0 0.0
        %1475 = vmatprep.subr.mxu0 0.0
        %1476 = vmatpush2.msra.mxu0 0.0
        %1477 = vmatprep.subr.mxu0 0.0
        %1478 = vmatpush2.msra.mxu0 0.0
        %1479 = vmatprep.subr.mxu0 0.0
        %1480 = vmatpush2.msra.mxu0 0.0
        %1481 = vmatprep.subr.mxu0 0.0
        %1482 = vmatpush2.msra.mxu0 0.0
        %1483 = vmatprep.mubr.f32.mxu0 0.0
        %1484 = vmatmul.mubr.f32.gmra.mxu0 %v1414
        %v1485 = vpop.f32.mrf.mxu0
        %v1486 = vadd.f32 0.0, %v1485
        %v1487 = vpop.f32.mrf.mxu0
        %1488 = vmatprep.mubr.f32.mxu0 0.0
        %1489 = vmatmul.mubr.f32.gmra.mxu0 %v1417
        %v1490 = vpop.f32.mrf.mxu0
        %v1491 = vadd.f32 0.0, %v1490
        %v1492 = vpop.f32.mrf.mxu0
        %1493 = vdwg.mxu0
        %v1494 = vadd.s32 %v1226, 3
        %v1495 = vadd.s32 %v1227, 3
        %vm1496 = vcmp.eq.s32.totalorder %v1225, %v1494
        %vm1497 = vcmp.eq.s32.totalorder %v1225, %v1495
        %v1498 = vsel %vm1496, 1, 0
        %v1499 = vsel %vm1497, 1, 0
        %v1500 = vcvt.s32.f32 %v1498
        %v1501 = vcvt.s32.f32 %v1499
        %v1503 = vsel %vm1234, %v1500, 0
        %v1506 = vsel %vm1234, %v1501, 0
        %1508 = vmatprep.subr.mxu0 0.0
        %1509 = vmatpush1.msra.mxu0 0.0
        %1510 = vmatprep.subr.mxu0 0.0
        %1511 = vmatpush1.msra.mxu0 0.0
        %1512 = vmatprep.subr.mxu0 0.0
        %1513 = vmatpush1.msra.mxu0 0.0
        %1514 = vmatprep.subr.mxu0 0.0
        %1515 = vmatpush1.msra.mxu0 0.0
        %1516 = vmatprep.subr.mxu0 0.0
        %1517 = vmatpush1.msra.mxu0 0.0
        %1518 = vmatprep.subr.mxu0 0.0
        %1519 = vmatpush1.msra.mxu0 0.0
        %1520 = vmatprep.subr.mxu0 0.0
        %1521 = vmatpush1.msra.mxu0 0.0
        %1522 = vmatprep.subr.mxu0 0.0
        %1523 = vmatpush1.msra.mxu0 0.0
        %1524 = vmatprep.subr.mxu0 0.0
        %1525 = vmatpush1.msra.mxu0 %v1220
        %1526 = vmatprep.subr.mxu0 0.0
        %1527 = vmatpush1.msra.mxu0 %v1020
        %1528 = vmatprep.subr.mxu0 0.0
        %1529 = vmatpush1.msra.mxu0 %v820
        %1530 = vmatprep.subr.mxu0 0.0
        %1531 = vmatpush1.msra.mxu0 %v620
        %1532 = vmatprep.subr.mxu0 0.0
        %1533 = vmatpush1.msra.mxu0 %v1219
        %1534 = vmatprep.subr.mxu0 0.0
        %1535 = vmatpush1.msra.mxu0 %v1019
        %1536 = vmatprep.subr.mxu0 0.0
        %1537 = vmatpush1.msra.mxu0 %v819
        %1538 = vmatprep.subr.mxu0 0.0
        %1539 = vmatpush1.msra.mxu0 %v619
        %1540 = vmatprep.subr.mxu0 0.0
        %1541 = vmatpush2.msra.mxu0 0.0
        %1542 = vmatprep.subr.mxu0 0.0
        %1543 = vmatpush2.msra.mxu0 0.0
        %1544 = vmatprep.subr.mxu0 0.0
        %1545 = vmatpush2.msra.mxu0 0.0
        %1546 = vmatprep.subr.mxu0 0.0
        %1547 = vmatpush2.msra.mxu0 0.0
        %1548 = vmatprep.subr.mxu0 0.0
        %1549 = vmatpush2.msra.mxu0 0.0
        %1550 = vmatprep.subr.mxu0 0.0
        %1551 = vmatpush2.msra.mxu0 0.0
        %1552 = vmatprep.subr.mxu0 0.0
        %1553 = vmatpush2.msra.mxu0 0.0
        %1554 = vmatprep.subr.mxu0 0.0
        %1555 = vmatpush2.msra.mxu0 0.0
        %1556 = vmatprep.subr.mxu0 0.0
        %1557 = vmatpush2.msra.mxu0 0.0
        %1558 = vmatprep.subr.mxu0 0.0
        %1559 = vmatpush2.msra.mxu0 0.0
        %1560 = vmatprep.subr.mxu0 0.0
        %1561 = vmatpush2.msra.mxu0 0.0
        %1562 = vmatprep.subr.mxu0 0.0
        %1563 = vmatpush2.msra.mxu0 0.0
        %1564 = vmatprep.subr.mxu0 0.0
        %1565 = vmatpush2.msra.mxu0 0.0
        %1566 = vmatprep.subr.mxu0 0.0
        %1567 = vmatpush2.msra.mxu0 0.0
        %1568 = vmatprep.subr.mxu0 0.0
        %1569 = vmatpush2.msra.mxu0 0.0
        %1570 = vmatprep.subr.mxu0 0.0
        %1571 = vmatpush2.msra.mxu0 0.0
        %1572 = vmatprep.mubr.f32.mxu0 0.0
        %1573 = vmatmul.mubr.f32.gmra.mxu0 %v1503
        %v1574 = vpop.f32.mrf.mxu0
        %v1575 = vadd.f32 0.0, %v1574
        %v1576 = vpop.f32.mrf.mxu0
        %1577 = vmatprep.mubr.f32.mxu0 0.0
        %1578 = vmatmul.mubr.f32.gmra.mxu0 %v1506
        %v1579 = vpop.f32.mrf.mxu0
        %v1580 = vadd.f32 0.0, %v1579
        %v1581 = vpop.f32.mrf.mxu0
        %1582 = vdwg.mxu0
        %1585 = vrot.lane.b32.xlu0 %v1397, 8
        %v1586 = vpop.permute.xlu0 %1585
        %1587 = vrot.lane.b32.xlu0 %v1402, 8
        %v1588 = vpop.permute.xlu0 %1587
        %1593 = vrot.lane.b32.xlu0 %v1486, 16
        %v1594 = vpop.permute.xlu0 %1593
        %1595 = vrot.lane.b32.xlu0 %v1491, 16
        %v1596 = vpop.permute.xlu0 %1595
        %1601 = vrot.lane.b32.xlu0 %v1575, 24
        %v1602 = vpop.permute.xlu0 %1601
        %1603 = vrot.lane.b32.xlu0 %v1580, 24
        %v1604 = vpop.permute.xlu0 %1603
        %v1607 = vsel %vm321, %v1308, %v1586
        %v1608 = vsel %vm321, %v1313, %v1588
        %v1609 = vsel %vm315, %v1607, %v1594
        %v1610 = vsel %vm315, %v1608, %v1596
        %vm1611 = vcmask 195584
        %v1612 = vsel %vm1611, %v1609, %v1602
        %v1613 = vsel %vm1611, %v1610, %v1604
        %v1614 = vld [vmem:[#allocation9] sm:$0xff]
        %v1615 = vld [vmem:[#allocation9 + $0x8] sm:$0xff]
        %v1616 = vld [vmem:[#allocation9 + $0x10] sm:$0xff]
        %v1617 = vld [vmem:[#allocation9 + $0x18] sm:$0xff]
        %v1618 = vld [vmem:[%s4] sm:$0x1]
        %v1620 = vlaneseq
        %v1621 = vshrl.u32 %v1620, 7
        %v1622 = vsub.s32 0, %v1621
        %v1623 = vrot.slane %v1618, %v1622
        %v1626 = vsel %vm341, %v1612, 0
        %v1629 = vsel %vm341, %v1613, 0
        %1631 = vmatprep.subr.mxu0 0.0
        %1632 = vmatpush1.msra.mxu0 0.0
        %1633 = vmatprep.subr.mxu0 0.0
        %1634 = vmatpush1.msra.mxu0 0.0
        %1635 = vmatprep.subr.mxu0 0.0
        %1636 = vmatpush1.msra.mxu0 0.0
        %1637 = vmatprep.subr.mxu0 0.0
        %1638 = vmatpush1.msra.mxu0 0.0
        %1639 = vmatprep.subr.mxu0 0.0
        %1640 = vmatpush1.msra.mxu0 0.0
        %1641 = vmatprep.subr.mxu0 0.0
        %1642 = vmatpush1.msra.mxu0 0.0
        %1643 = vmatprep.subr.mxu0 0.0
        %1644 = vmatpush1.msra.mxu0 0.0
        %1645 = vmatprep.subr.mxu0 0.0
        %1646 = vmatpush1.msra.mxu0 0.0
        %1647 = vmatprep.subr.mxu0 0.0
        %1648 = vmatpush1.msra.mxu0 0.0
        %1649 = vmatprep.subr.mxu0 0.0
        %1650 = vmatpush1.msra.mxu0 0.0
        %1651 = vmatprep.subr.mxu0 0.0
        %1652 = vmatpush1.msra.mxu0 0.0
        %1653 = vmatprep.subr.mxu0 0.0
        %1654 = vmatpush1.msra.mxu0 0.0
        %1655 = vmatprep.subr.mxu0 0.0
        %1656 = vmatpush1.msra.mxu0 %v1617
        %1657 = vmatprep.subr.mxu0 0.0
        %1658 = vmatpush1.msra.mxu0 %v1616
        %1659 = vmatprep.subr.mxu0 0.0
        %1660 = vmatpush1.msra.mxu0 %v1615
        %1661 = vmatprep.subr.mxu0 0.0
        %1662 = vmatpush1.msra.mxu0 %v1614
        %1663 = vmatprep.subr.mxu0 0.0
        %1664 = vmatpush2.msra.mxu0 0.0
        %1665 = vmatprep.subr.mxu0 0.0
        %1666 = vmatpush2.msra.mxu0 0.0
        %1667 = vmatprep.subr.mxu0 0.0
        %1668 = vmatpush2.msra.mxu0 0.0
        %1669 = vmatprep.subr.mxu0 0.0
        %1670 = vmatpush2.msra.mxu0 0.0
        %1671 = vmatprep.subr.mxu0 0.0
        %1672 = vmatpush2.msra.mxu0 0.0
        %1673 = vmatprep.subr.mxu0 0.0
        %1674 = vmatpush2.msra.mxu0 0.0
        %1675 = vmatprep.subr.mxu0 0.0
        %1676 = vmatpush2.msra.mxu0 0.0
        %1677 = vmatprep.subr.mxu0 0.0
        %1678 = vmatpush2.msra.mxu0 0.0
        %1679 = vmatprep.subr.mxu0 0.0
        %1680 = vmatpush2.msra.mxu0 0.0
        %1681 = vmatprep.subr.mxu0 0.0
        %1682 = vmatpush2.msra.mxu0 0.0
        %1683 = vmatprep.subr.mxu0 0.0
        %1684 = vmatpush2.msra.mxu0 0.0
        %1685 = vmatprep.subr.mxu0 0.0
        %1686 = vmatpush2.msra.mxu0 0.0
        %1687 = vmatprep.subr.mxu0 0.0
        %1688 = vmatpush2.msra.mxu0 0.0
        %1689 = vmatprep.subr.mxu0 0.0
        %1690 = vmatpush2.msra.mxu0 0.0
        %1691 = vmatprep.subr.mxu0 0.0
        %1692 = vmatpush2.msra.mxu0 0.0
        %1693 = vmatprep.subr.mxu0 0.0
        %1694 = vmatpush2.msra.mxu0 0.0
        %1695 = vmatprep.mubr.f32.mxu0 0.0
        %1696 = vmatmul.mubr.f32.gmra.mxu0 %v1626
        %v1697 = vpop.f32.mrf.mxu0
        %v1698 = vadd.f32 %v1623, %v1697
        %v1699 = vpop.f32.mrf.mxu0
        %1700 = vmatprep.mubr.f32.mxu0 0.0
        %1701 = vmatmul.mubr.f32.gmra.mxu0 %v1629
        %v1702 = vpop.f32.mrf.mxu0
        %v1703 = vadd.f32 %v1623, %v1702
        %v1704 = vpop.f32.mrf.mxu0
        %1705 = vdwg.mxu0
        %1706 = vst.msk [vmem:[%s311] sm:$0xff] %vm341, %v1698
        %1707 = vst.msk [vmem:[%s311 + $0x8] sm:$0xff] %vm341, %v1703
        %s1708 = sand.u32 %s149, 1
        %s1709 = scalar_lea.sflag [#allocation5], %s1708
        %s1710 = sand.u32 %s149, 1
        %s1711 = smul.addr %s1710, 16
        %s1712 = scalar_lea.vmem [#allocation11], %s1711
        // Predicated region
        $region57: #{tpu_custom_call.1} parent=39 // pred_check
          %p1713 = pneg %p159
        $region58: #{tpu_custom_call.1} parent=39 // pred_check_branch
          %1715 = sbr.rel (%p1713) target = $region60
        $region59: #{tpu_custom_call.1} parent=39 // pred_region
          %s1716 = smul.u32 2, %s26
          %s1718 = ssub.s32 256, 256
          %1719 = vsyncadd %s1709, %s1718
          %s1720 = smul.addr %s1716, 128
          %s1721 = scalar_lea.hbm %s5, %s1720
          %s1722 = sshll.u32 %s1712, 4
          %s1723 = int_to_ptr.vmem [resolvable:$true] %s1722
          %1728 = dma.vmem_to_hbm [thread:$0]  %s1723, 256, %s1721, %s1709, 128, 128, 8
        $region60: #{tpu_custom_call.1} parent=39 // pred_fallthru
          _
      $region40: #{tpu_custom_call.1} parent=5 // pred_fallthru
        _
      %p1729 = scmp.le.s32.totalorder 2, %s21
      // Predicated region
      $region61: #{tpu_custom_call.1} parent=5 // pred_check
        %p1730 = pneg %p1729
      $region62: #{tpu_custom_call.1} parent=5 // pred_check_branch
        %1732 = sbr.rel (%p1730) target = $region64
      $region63: #{tpu_custom_call.1} parent=5 // pred_region
        %s1733 = ssub.s32 %s21, 2
        // Predicated region
        $region65: #{tpu_custom_call.1} parent=63 // pred_check
          %p1734 = pneg %p165
        $region66: #{tpu_custom_call.1} parent=63 // pred_check_branch
          %1736 = sbr.rel (%p1734) target = $region68
        $region67: #{tpu_custom_call.1} parent=63 // pred_region
          %s1737 = sand.u32 %s150, 1
          %s1738 = scalar_lea.sflag [#allocation5], %s1737
          %s1739 = sand.u32 %s150, 1
          %s1740 = smul.addr %s1739, 16
          %s1741 = scalar_lea.vmem [#allocation11], %s1740
          %1742 = dma.done %s1738, 256
        $region68: #{tpu_custom_call.1} parent=63 // pred_fallthru
          _
      $region64: #{tpu_custom_call.1} parent=5 // pred_fallthru
        _
    $region6: #{tpu_custom_call.1} parent=1 // loop_footer
      %s25 = sadd.s32 1, %s21
    $region7: #{tpu_custom_call.1} parent=1 // loop_footer_branch
      %20 = sbr.rel target = $region3
    $region8: #{tpu_custom_call.1} parent=1 // loop_exit
      _
    %1743 = vsyncpa [#allocation4], 1
    %s1744 = scalar_lea.sflag [#allocation4], 1
    %1745 = vsyncpa %s1744, 1
    %1746 = vsyncpa [#allocation7], 1
    %s1747 = scalar_lea.sflag [#allocation7], 1
    %1748 = vsyncpa %s1747, 1
    %1749 = vsyncpa [#allocation10], 1
    %1750 = vsyncpa [#allocation5], 1
    %s1751 = scalar_lea.sflag [#allocation5], 1
    %1752 = vsyncpa %s1751, 1

</llo_original>
